<compile_context>
chip_gen: v7x
topology: tpu7x:2x2x1
jax: 0.10.0
libtpu: 0.0.40
codegen_flags: <defaults>
</compile_context>

<pallas_src>
import functools

import jax
import jax.numpy as jnp
from jax.experimental import pallas as pl
from jax.experimental.pallas import tpu as pltpu


def _round_up(x, m):
    return (x + m - 1) // m * m


def _cdiv(a, b):
    return (a + b - 1) // b


# ----------------------------------------------------------------------------
# Pallas kernel: fused one-hot-MXU gather + triplet margin loss partial sums
# (p=2, eps=1e-6, reduction='mean' finalized in JAX)
# ----------------------------------------------------------------------------
def _triplet_partial_kernel(q_ref, t_ref, n_ref, emb_ref, out_ref, *,
                            margin, num_triplets, tn):
    emb = emb_ref[...]                                # [B_pad, D] resident block
    b_pad = emb.shape[0]

    qi = q_ref[...]                                   # [TN, 1] int32
    ti = t_ref[...]                                   # [TN, 1] int32
    ni = n_ref[...]                                   # [TN, 1] int32

    # Signed one-hot weights over a lane-padded batch dim: {-1, 0, +1}.
    lane = jax.lax.broadcasted_iota(jnp.int32, (tn, b_pad), 1)
    oh_q = (qi == lane).astype(jnp.float32)           # [TN, B_pad]
    w_ap = oh_q - (ti == lane).astype(jnp.float32)    # anchor - positive selector
    w_an = oh_q - (ni == lane).astype(jnp.float32)    # anchor - negative selector

    # Difference vectors straight off the MXU: dap = emb[q] - emb[t], etc.
    # HIGHEST precision keeps f32 embeds exact (no silent bf16 rounding).
    dot = functools.partial(
        jnp.dot,
        preferred_element_type=jnp.float32,
        precision=jax.lax.Precision.HIGHEST,
    )
    eps = jnp.float32(1e-6)
    dap = dot(w_ap, emb) + eps                        # [TN, D]
    dan = dot(w_an, emb) + eps                        # [TN, D]

    # keepdims: intermediates stay 2-D [TN, 1]; sqrt lands on the idle EUP slot.
    d_ap = jnp.sqrt(jnp.sum(dap * dap, axis=-1, keepdims=True))
    d_an = jnp.sqrt(jnp.sum(dan * dan, axis=-1, keepdims=True))
    hinge = jnp.maximum(d_ap - d_an + jnp.float32(margin), 0.0)   # [TN, 1]

    # Mask padded tail rows so they do not contribute relu(margin).
    row_id = pl.program_id(0) * tn + jax.lax.broadcasted_iota(jnp.int32, (tn, 1), 0)
    hinge = jnp.where(row_id < num_triplets, hinge, 0.0)

    # Per-chunk partial sum, stored lane-dense (full 128-lane unmasked store).
    partial = jnp.sum(hinge)
    out_ref[...] = jnp.broadcast_to(partial, out_ref.shape)


def triplet_margin_loss_pallas(embeds, q_idx, t_idx, n_idx, margin=1.0):
    """embeds: [B, D]; q/t/n_idx: [N] int32 in [0, B). Returns scalar f32 mean loss."""
    num_triplets = int(q_idx.shape[0])
    if num_triplets == 0:
        return jnp.float32(0.0)
    B, D = embeds.shape

    # Pad batch dim to a multiple of 128 lanes for the one-hot matmul; padded
    # rows are zeros and are never selected (indices are in [0, B)).
    B_pad = _round_up(B, 128)
    emb_p = jnp.pad(embeds, ((0, B_pad - B), (0, 0)))

    # Chunk size: multiple of 8 sublanes, capped at 256 (vreg pressure is the
    # binding constraint, not VMEM), and chosen so num_chunks >= 2 whenever
    # possible so the "parallel" grid axis shards across both v7x TensorCores.
    TN = min(256, max(8, _round_up(_cdiv(num_triplets, 2), 8)))
    N_pad = _round_up(num_triplets, TN)
    num_chunks = N_pad // TN

    def pad_idx(ix):
        ix = ix.astype(jnp.int32).reshape(-1, 1)
        return jnp.pad(ix, ((0, N_pad - num_triplets), (0, 0)))

    q_p, t_p, n_p = pad_idx(q_idx), pad_idx(t_idx), pad_idx(n_idx)

    kernel = functools.partial(
        _triplet_partial_kernel,
        margin=float(margin), num_triplets=num_triplets, tn=TN)

    # TODO(synk): for very large B (>~32K rows on v5e) the resident embeds block
    # exceeds the default scoped-VMEM budget; raise vmem_limit_bytes or tile the
    # one-hot matmul's K dimension with a second grid axis.
    partials = pl.pallas_call(
        kernel,
        out_shape=jax.ShapeDtypeStruct((num_chunks, 1, 128), jnp.float32),
        grid=(num_chunks,),
        in_specs=[
            pl.BlockSpec((TN, 1), lambda i: (i, 0)),       # q indices chunk
            pl.BlockSpec((TN, 1), lambda i: (i, 0)),       # t indices chunk
            pl.BlockSpec((TN, 1), lambda i: (i, 0)),       # n indices chunk
            pl.BlockSpec((B_pad, D), lambda i: (0, 0)),    # full embeds, resident
        ],
        out_specs=pl.BlockSpec((1, 1, 128), lambda i: (i, 0, 0)),
        compiler_params=pltpu.CompilerParams(
            dimension_semantics=("parallel",)),            # chunks independent -> both TCs on v7x
    )(q_p, t_p, n_p, emb_p)

    # Tiny finalize in JAX: sum partials, multiply by precomputed 1/num_triplets.
    return jnp.sum(partials[:, 0, 0]) * jnp.float32(1.0 / num_triplets)


# ----------------------------------------------------------------------------
# Glue: deterministic stand-in encoder + triplet index plumbing (plain JAX)
# ----------------------------------------------------------------------------
# TODO(synk): `encoder = models[0]`, `self.data.load_meta(...)` and the
# debug_log.txt file I/O are external dependencies; replaced by a deterministic
# linear encoder, synthetic indices, and no file writes.
def standin_encoder(trip, lengths, w, b):
    """trip: [B, L, F] -> embeds [B, latent]. Masked mean-pool over time + linear."""
    B, L, F = trip.shape
    mask = (jnp.arange(L)[None, :] < lengths[:, None]).astype(trip.dtype)  # [B, L]
    pooled = jnp.sum(trip * mask[:, :, None], axis=1) / jnp.maximum(
        lengths[:, None].astype(trip.dtype), 1.0
    )  # [B, F]
    return pooled @ w + b  # [B, latent]


def triplet_loss_forward(trip, lengths, qry_idx, tgt_idx, neg_idx, enc_w, enc_b,
                         margin=1.0, perm_key=None):
    batch_size = trip.shape[0]
    trip = jnp.nan_to_num(trip, nan=0.0)
    embeds = standin_encoder(trip, lengths, enc_w, enc_b)  # [B, latent] f32

    num_triplets = min(int(qry_idx.shape[0]), batch_size * 10)
    if num_triplets == 0:
        return jnp.float32(0.0)

    # deterministic "randperm" sampling
    sample_idx = jax.random.permutation(perm_key, qry_idx.shape[0])[:num_triplets]
    q = qry_idx[sample_idx] % batch_size
    t = tgt_idx[sample_idx] % batch_size
    n = neg_idx[sample_idx] % batch_size

    # Gather is fused into the kernel (embeds + index vectors go in; no [N, 128]
    # anchor/positive/negative arrays in HBM).
    return triplet_margin_loss_pallas(embeds, q, t, n, margin=margin)


# ----------------------------------------------------------------------------
# Main
# ----------------------------------------------------------------------------
if __name__ == "__main__":
    key = jax.random.PRNGKey(0)
    k_trip, k_w, k_b, k_q, k_t, k_n, k_perm = jax.random.split(key, 7)

    batch = 2
    seq = 8
    feat = 9          # [tod, road, road_prop, lng, lat, weekday, seq_i, seconds, offset]
    latent = 128      # latent_size default
    margin = 1.0

    trip = jax.random.normal(k_trip, (batch, seq, feat), dtype=jnp.float32)
    # inject a NaN to exercise nan_to_num semantics
    trip = trip.at[0, 0, 0].set(jnp.nan)
    lengths = jnp.array([8, 5], dtype=jnp.int32)

    # deterministic encoder params
    enc_w = jax.random.normal(k_w, (feat, latent), dtype=jnp.float32) * 0.1
    enc_b = jax.random.normal(k_b, (latent,), dtype=jnp.float32) * 0.01

    # synthetic triplet index table (stand-in for ksegsimidx-100-200)
    n_idx = 50
    qry_idx = jax.random.randint(k_q, (n_idx,), 0, 1000, dtype=jnp.int32)
    tgt_idx = jax.random.randint(k_t, (n_idx,), 0, 1000, dtype=jnp.int32)
    neg_idx = jax.random.randint(k_n, (n_idx,), 0, 1000, dtype=jnp.int32)

    loss = triplet_loss_forward(
        trip, lengths, qry_idx, tgt_idx, neg_idx, enc_w, enc_b,
        margin=margin, perm_key=k_perm,
    )
    loss = jax.block_until_ready(loss)

    # sanity check vs. pure-JAX reference
    def ref_loss(a, p, n):
        eps = 1e-6
        d_ap = jnp.sqrt(jnp.sum((a - p + eps) ** 2, axis=-1))
        d_an = jnp.sqrt(jnp.sum((a - n + eps) ** 2, axis=-1))
        return jnp.mean(jnp.maximum(d_ap - d_an + margin, 0.0))

    trip_c = jnp.nan_to_num(trip, nan=0.0)
    embeds = standin_encoder(trip_c, lengths, enc_w, enc_b)
    num_triplets = min(n_idx, batch * 10)
    sample_idx = jax.random.permutation(k_perm, n_idx)[:num_triplets]
    q = qry_idx[sample_idx] % batch
    t = tgt_idx[sample_idx] % batch
    n = neg_idx[sample_idx] % batch
    expected = ref_loss(embeds[q], embeds[t], embeds[n])

    assert jnp.allclose(loss, expected, rtol=1e-5, atol=1e-5), (loss, expected)
    print("KERNEL_OK")
</pallas_src>

<mosaic_0001>
module attributes {stable_mosaic.version = 11 : i64} {
  func.func @_triplet_partial_kernel(%arg0: i32, %arg1: memref<16x1xi32, #tpu.memory_space<vmem>>, %arg2: memref<16x1xi32, #tpu.memory_space<vmem>>, %arg3: memref<16x1xi32, #tpu.memory_space<vmem>>, %arg4: memref<128x128xf32, #tpu.memory_space<vmem>>, %arg5: memref<1x1x128xf32, #tpu.memory_space<vmem>>) attributes {dimension_semantics = [#tpu.dimension_semantics<parallel>], iteration_bounds = array<i64: 2>, scalar_prefetch = 0 : i64, scratch_operands = 0 : i64, tpu.core_type = #tpu.core_type<tc>, window_params = [{transform_indices = @transform_0, window_bounds = array<i64: 16, 1>}, {transform_indices = @transform_1, window_bounds = array<i64: 16, 1>}, {transform_indices = @transform_2, window_bounds = array<i64: 16, 1>}, {pipeline_mode = #tpu.pipeline_mode<synchronous>, transform_indices = @transform_3, window_bounds = array<i64: 128, 128>}, {transform_indices = @transform_4, window_bounds = array<i64: 1, 1, 128>}]} {
    %c0 = arith.constant 0 : index
    %c0_0 = arith.constant 0 : index
    %0 = vector.load %arg4[%c0, %c0_0] : memref<128x128xf32, #tpu.memory_space<vmem>>, vector<128x128xf32>
    %c0_1 = arith.constant 0 : index
    %c0_2 = arith.constant 0 : index
    %1 = vector.load %arg1[%c0_1, %c0_2] : memref<16x1xi32, #tpu.memory_space<vmem>>, vector<16x1xi32>
    %c0_3 = arith.constant 0 : index
    %c0_4 = arith.constant 0 : index
    %2 = vector.load %arg2[%c0_3, %c0_4] : memref<16x1xi32, #tpu.memory_space<vmem>>, vector<16x1xi32>
    %c0_5 = arith.constant 0 : index
    %c0_6 = arith.constant 0 : index
    %3 = vector.load %arg3[%c0_5, %c0_6] : memref<16x1xi32, #tpu.memory_space<vmem>>, vector<16x1xi32>
    %4 = tpu.iota {dimensions = array<i32: 1>} : vector<16x128xi32>
    %5 = vector.broadcast %1 : vector<16x1xi32> to vector<16x128xi32>
    %6 = arith.cmpi eq, %5, %4 : vector<16x128xi32>
    %7 = arith.extui %6 : vector<16x128xi1> to vector<16x128xi32>
    %8 = arith.sitofp %7 : vector<16x128xi32> to vector<16x128xf32>
    %9 = vector.broadcast %2 : vector<16x1xi32> to vector<16x128xi32>
    %10 = arith.cmpi eq, %9, %4 : vector<16x128xi32>
    %11 = arith.extui %10 : vector<16x128xi1> to vector<16x128xi32>
    %12 = arith.sitofp %11 : vector<16x128xi32> to vector<16x128xf32>
    %13 = arith.subf %8, %12 : vector<16x128xf32>
    %14 = vector.broadcast %3 : vector<16x1xi32> to vector<16x128xi32>
    %15 = arith.cmpi eq, %14, %4 : vector<16x128xi32>
    %16 = arith.extui %15 : vector<16x128xi1> to vector<16x128xi32>
    %17 = arith.sitofp %16 : vector<16x128xi32> to vector<16x128xf32>
    %18 = arith.subf %8, %17 : vector<16x128xf32>
    %cst = arith.constant dense<0.000000e+00> : vector<16x128xf32>
    %19 = tpu.matmul %13, %0, %cst {dimension_numbers = #tpu.dot_dimension_numbers<[1], [0], [0], [1], [0, 0, 1, 1], [], []>, precision = #tpu.contract_precision<fp32>} : vector<16x128xf32>, vector<128x128xf32>, vector<16x128xf32> -> vector<16x128xf32>
    %cst_7 = arith.constant 9.99999997E-7 : f32
    %20 = vector.broadcast %cst_7 : f32 to vector<16x128xf32>
    %21 = arith.addf %19, %20 : vector<16x128xf32>
    %cst_8 = arith.constant dense<0.000000e+00> : vector<16x128xf32>
    %22 = tpu.matmul %18, %0, %cst_8 {dimension_numbers = #tpu.dot_dimension_numbers<[1], [0], [0], [1], [0, 0, 1, 1], [], []>, precision = #tpu.contract_precision<fp32>} : vector<16x128xf32>, vector<128x128xf32>, vector<16x128xf32> -> vector<16x128xf32>
    %cst_9 = arith.constant 9.99999997E-7 : f32
    %23 = vector.broadcast %cst_9 : f32 to vector<16x128xf32>
    %24 = arith.addf %22, %23 : vector<16x128xf32>
    %25 = arith.mulf %21, %21 : vector<16x128xf32>
    %cst_10 = arith.constant dense<0.000000e+00> : vector<16xf32>
    %26 = vector.multi_reduction <add>, %25, %cst_10 [1] : vector<16x128xf32> to vector<16xf32>
    %27 = vector.shape_cast %26 : vector<16xf32> to vector<16x1xf32>
    %28 = math.sqrt %27 : vector<16x1xf32>
    %29 = arith.mulf %24, %24 : vector<16x128xf32>
    %cst_11 = arith.constant dense<0.000000e+00> : vector<16xf32>
    %30 = vector.multi_reduction <add>, %29, %cst_11 [1] : vector<16x128xf32> to vector<16xf32>
    %31 = vector.shape_cast %30 : vector<16xf32> to vector<16x1xf32>
    %32 = math.sqrt %31 : vector<16x1xf32>
    %33 = arith.subf %28, %32 : vector<16x1xf32>
    %cst_12 = arith.constant 1.000000e+00 : f32
    %34 = vector.broadcast %cst_12 : f32 to vector<16x1xf32>
    %35 = arith.addf %33, %34 : vector<16x1xf32>
    %cst_13 = arith.constant 0.000000e+00 : f32
    %36 = vector.broadcast %cst_13 : f32 to vector<16x1xf32>
    %37 = arith.maximumf %35, %36 : vector<16x1xf32>
    %c16_i32 = arith.constant 16 : i32
    %38 = arith.muli %arg0, %c16_i32 : i32
    %39 = tpu.iota {dimensions = array<i32: 0>} : vector<16x1xi32>
    %40 = vector.broadcast %38 : i32 to vector<16x1xi32>
    %41 = arith.addi %40, %39 : vector<16x1xi32>
    %c20_i32 = arith.constant 20 : i32
    %42 = vector.broadcast %c20_i32 : i32 to vector<16x1xi32>
    %43 = arith.cmpi slt, %41, %42 : vector<16x1xi32>
    %cst_14 = arith.constant 0.000000e+00 : f32
    %44 = vector.broadcast %cst_14 : f32 to vector<16x1xf32>
    %45 = arith.select %43, %37, %44 : vector<16x1xi1>, vector<16x1xf32>
    %46 = vector.shape_cast %45 : vector<16x1xf32> to vector<1x16x1xf32>
    %cst_15 = arith.constant dense<0.000000e+00> : vector<1xf32>
    %47 = vector.multi_reduction <add>, %46, %cst_15 [1, 2] : vector<1x16x1xf32> to vector<1xf32>
    %48 = vector.shape_cast %47 : vector<1xf32> to vector<1x1x1xf32>
    %49 = vector.extract %48[0, 0, 0] : f32 from vector<1x1x1xf32>
    %50 = vector.broadcast %49 : f32 to vector<1x1x128xf32>
    %c0_16 = arith.constant 0 : index
    %c0_17 = arith.constant 0 : index
    %c0_18 = arith.constant 0 : index
    %51 = vector.load %arg5[%c0_16, %c0_17, %c0_18] : memref<1x1x128xf32, #tpu.memory_space<vmem>>, vector<1x1x128xf32>
    tpu.vector_store %arg5[%c0_16, %c0_17, %c0_18], %50 {strides = array<i32>} : memref<1x1x128xf32, #tpu.memory_space<vmem>>, vector<1x1x128xf32>,
    return
  }
  func.func @transform_0(%arg0: i32) -> (i32, i32) {
    %c0_i32 = arith.constant 0 : i32
    %c0_i32_0 = arith.constant 0 : i32
    return %arg0, %c0_i32 : i32, i32
  }
  func.func @transform_1(%arg0: i32) -> (i32, i32) {
    %c0_i32 = arith.constant 0 : i32
    %c0_i32_0 = arith.constant 0 : i32
    return %arg0, %c0_i32 : i32, i32
  }
  func.func @transform_2(%arg0: i32) -> (i32, i32) {
    %c0_i32 = arith.constant 0 : i32
    %c0_i32_0 = arith.constant 0 : i32
    return %arg0, %c0_i32 : i32, i32
  }
  func.func @transform_3(%arg0: i32) -> (i32, i32) {
    %c0_i32 = arith.constant 0 : i32
    %c0_i32_0 = arith.constant 0 : i32
    %c0_i32_1 = arith.constant 0 : i32
    return %c0_i32, %c0_i32_0 : i32, i32
  }
  func.func @transform_4(%arg0: i32) -> (i32, i32, i32) {
    %c0_i32 = arith.constant 0 : i32
    %c0_i32_0 = arith.constant 0 : i32
    %c0_i32_1 = arith.constant 0 : i32
    return %arg0, %c0_i32, %c0_i32_0 : i32, i32, i32
  }
}

</mosaic_0001>

<llo_original>
// kernel: tpu_custom_call.1
$region0: #{tpu_custom_call.1}
  #allocation0 [shape = 'u32[]', space=smem, size = 0x4, offset = 0x4, fixed_abs, tag = 'smem constant byte address 0x4 - core index']
  #allocation1 [shape = 'u32[144,128]{1,0:T(1,128)}', space=vmem, size = 0x12000, scoped, tag = 'internal scratch']
  %s0 = inlined_call_operand.vmem [shape: s32[32,1], index: 0, kind: input, shape index: {}]
  %s1 = inlined_call_operand.vmem [shape: s32[32,1], index: 1, kind: input, shape index: {}]
  %s2 = inlined_call_operand.vmem [shape: s32[32,1], index: 2, kind: input, shape index: {}]
  %s3 = inlined_call_operand.hbm [shape: f32[128,128], index: 3, kind: input, shape index: {}]
  %s4 = inlined_call_operand.hbm [shape: f32[2,1,128], index: 4, kind: output, shape index: {}]
  %s5 = sld [smem:[#allocation0]]
  $region53: #{tpu_custom_call.1} parent=0
    _
  %s7 = ssub.s32 1, %s5
  %s8 = scalar_select 0, %s7, %s5
  $region1: #{tpu_custom_call.1} parent=0
    #allocation2 [shape = 'u8[65536]{0}', space=vmem, size = 0x10000, scoped, tag = 'input window, operand 3, single buffered']
    #allocation3 [shape = 's32[2]{0}', space=sflag, size = 0x8, scoped, tag = 'scoped memory for tpu_custom_call.1']
    #allocation4 [shape = 's32[2]{0}', space=sflag, size = 0x8, scoped, tag = 'scoped memory for tpu_custom_call.1']
    #allocation5 [shape = 'u8[1024]{0}', space=vmem, size = 0x400, scoped, tag = 'output window, operand 0']
    %9 = vsyncpa [#allocation3], 0
    %10 = vsyncpa [#allocation4], 0
    %s11 = scalar_lea.sflag [#allocation4], 1
    %12 = vsyncpa %s11, 0
    loop: start=0, step=1, limit=4
    $region2: #{tpu_custom_call.1} parent=1 // loop_pre_header
      _
    $region3: #{tpu_custom_call.1} parent=1 // loop_header
      %s14 = sphi 0, %s18
      %p15 = scmp.ge.s32.totalorder %s14, 4
      %s24 = sphi 0, %s26
      %s27 = sphi 0, %s24
      %s28 = sphi 0, %s27
      %s44 = sphi 0, %s28
      %s50 = sphi 0, %s52
      %s53 = sphi 0, %s50
      %s54 = sphi 0, %s53
      %s70 = sphi 0, %s54
      %s76 = sphi 0, %s78
      %s79 = sphi 0, %s76
      %s80 = sphi 0, %s79
      %s96 = sphi 0, %s80
      %s100 = sphi 0, %s100
      %s102 = sphi 0, %s100
      %s103 = sphi 0, %s102
      %s117 = sphi 0, %s103
      %s123 = sphi 0, %s125
      %s126 = sphi 0, %s123
      %s127 = sphi 0, %s126
      %s143 = sphi 0, %s127
    $region4: #{tpu_custom_call.1} parent=1 // loop_header_branch
      %17 = sbr.rel (%p15) target = $region8
    $region5: #{tpu_custom_call.1} parent=1 // loop_body
      %s19 = ssub.s32 %s14, 1
      %s20 = ssub.s32 %s14, 2
      %s21 = sadd.s32 %s14, 1
      %s22 = ssub.s32 %s14, %s21
      %p23 = scmp.eq.s32.totalorder %s22, 0
      %s25 = sadd.s32 %s24, 1
      %s26 = scalar_select %p23, %s24, %s25
      %p29 = pneg %p23
      %p30 = scmp.eq.s32.totalorder %s14, 1
      %p31 = por %p29, %p30
      %p32 = scmp.ne.s32.totalorder %s24, %s27
      %p33 = scmp.eq.s32.totalorder %s14, 0
      %p34 = por %p32, %p33
      %p35 = scmp.ne.s32.totalorder %s24, %s27
      %p36 = scmp.eq.s32.totalorder %s19, 1
      %p37 = por %p35, %p36
      %p38 = scmp.ne.s32.totalorder %s27, %s28
      %p39 = scmp.eq.s32.totalorder %s19, 0
      %p40 = por %p38, %p39
      %p41 = scmp.ne.s32.totalorder %s27, %s28
      %p42 = scmp.eq.s32.totalorder %s20, 1
      %p43 = por %p41, %p42
      %p45 = scmp.ne.s32.totalorder %s28, %s44
      %p46 = scmp.eq.s32.totalorder %s20, 0
      %p47 = por %p45, %p46
      %s48 = ssub.s32 %s14, %s21
      %p49 = scmp.eq.s32.totalorder %s48, 0
      %s51 = sadd.s32 %s50, 1
      %s52 = scalar_select %p49, %s50, %s51
      %p55 = pneg %p49
      %p56 = scmp.eq.s32.totalorder %s14, 1
      %p57 = por %p55, %p56
      %p58 = scmp.ne.s32.totalorder %s50, %s53
      %p59 = scmp.eq.s32.totalorder %s14, 0
      %p60 = por %p58, %p59
      %p61 = scmp.ne.s32.totalorder %s50, %s53
      %p62 = scmp.eq.s32.totalorder %s19, 1
      %p63 = por %p61, %p62
      %p64 = scmp.ne.s32.totalorder %s53, %s54
      %p65 = scmp.eq.s32.totalorder %s19, 0
      %p66 = por %p64, %p65
      %p67 = scmp.ne.s32.totalorder %s53, %s54
      %p68 = scmp.eq.s32.totalorder %s20, 1
      %p69 = por %p67, %p68
      %p71 = scmp.ne.s32.totalorder %s54, %s70
      %p72 = scmp.eq.s32.totalorder %s20, 0
      %p73 = por %p71, %p72
      %s74 = ssub.s32 %s14, %s21
      %p75 = scmp.eq.s32.totalorder %s74, 0
      %s77 = sadd.s32 %s76, 1
      %s78 = scalar_select %p75, %s76, %s77
      %p81 = pneg %p75
      %p82 = scmp.eq.s32.totalorder %s14, 1
      %p83 = por %p81, %p82
      %p84 = scmp.ne.s32.totalorder %s76, %s79
      %p85 = scmp.eq.s32.totalorder %s14, 0
      %p86 = por %p84, %p85
      %p87 = scmp.ne.s32.totalorder %s76, %s79
      %p88 = scmp.eq.s32.totalorder %s19, 1
      %p89 = por %p87, %p88
      %p90 = scmp.ne.s32.totalorder %s79, %s80
      %p91 = scmp.eq.s32.totalorder %s19, 0
      %p92 = por %p90, %p91
      %p93 = scmp.ne.s32.totalorder %s79, %s80
      %p94 = scmp.eq.s32.totalorder %s20, 1
      %p95 = por %p93, %p94
      %p97 = scmp.ne.s32.totalorder %s80, %s96
      %p98 = scmp.eq.s32.totalorder %s20, 0
      %p99 = por %p97, %p98
      %s101 = sadd.s32 %s100, 1
      %p104 = scmp.eq.s32.totalorder %s14, 1
      %p105 = scmp.ne.s32.totalorder %s100, %s102
      %p106 = scmp.eq.s32.totalorder %s14, 0
      %p107 = por %p105, %p106
      %p108 = scmp.ne.s32.totalorder %s100, %s102
      %p109 = scmp.eq.s32.totalorder %s19, 1
      %p110 = por %p108, %p109
      %p111 = scmp.ne.s32.totalorder %s102, %s103
      %p112 = scmp.eq.s32.totalorder %s19, 0
      %p113 = por %p111, %p112
      %p114 = scmp.ne.s32.totalorder %s102, %s103
      %p115 = scmp.eq.s32.totalorder %s20, 1
      %p116 = por %p114, %p115
      %p118 = scmp.ne.s32.totalorder %s103, %s117
      %p119 = scmp.eq.s32.totalorder %s20, 0
      %p120 = por %p118, %p119
      %s121 = ssub.s32 %s14, %s21
      %p122 = scmp.eq.s32.totalorder %s121, 0
      %s124 = sadd.s32 %s123, 1
      %s125 = scalar_select %p122, %s123, %s124
      %p128 = pneg %p122
      %p129 = scmp.eq.s32.totalorder %s14, 1
      %p130 = por %p128, %p129
      %p131 = scmp.ne.s32.totalorder %s123, %s126
      %p132 = scmp.eq.s32.totalorder %s14, 0
      %p133 = por %p131, %p132
      %p134 = scmp.ne.s32.totalorder %s123, %s126
      %p135 = scmp.eq.s32.totalorder %s19, 1
      %p136 = por %p134, %p135
      %p137 = scmp.ne.s32.totalorder %s126, %s127
      %p138 = scmp.eq.s32.totalorder %s19, 0
      %p139 = por %p137, %p138
      %p140 = scmp.ne.s32.totalorder %s126, %s127
      %p141 = scmp.eq.s32.totalorder %s20, 1
      %p142 = por %p140, %p141
      %p144 = scmp.ne.s32.totalorder %s127, %s143
      %p145 = scmp.eq.s32.totalorder %s20, 0
      %p146 = por %p144, %p145
      %p147 = scmp.le.s32.totalorder 1, %s14
      %p148 = scmp.lt.s32.totalorder %s14, 3
      %p149 = pnand %p147, %p148
      %p150 = pneg %p149
      // Predicated region
      $region9: #{tpu_custom_call.1} parent=5 // pred_check
        _
      $region10: #{tpu_custom_call.1} parent=5 // pred_check_branch
        %152 = sbr.rel (%p149) target = $region12
      $region11: #{tpu_custom_call.1} parent=5 // pred_region
        %s153 = ssub.s32 %s14, 1
        // Predicated region
        $region13: #{tpu_custom_call.1} parent=11 // pred_check
          %p154 = pneg %p113
        $region14: #{tpu_custom_call.1} parent=11 // pred_check_branch
          %156 = sbr.rel (%p154) target = $region16
        $region15: #{tpu_custom_call.1} parent=11 // pred_region
          %s158 = ssub.s32 2048, 2048
          %159 = vsyncadd [#allocation3], %s158
          %s160 = sshll.u32 [#allocation2], 4
          %s161 = int_to_ptr.vmem [resolvable:$true] %s160
          %166 = dma.hbm_to_vmem [thread:$0]  %s3, 2048, %s161, [#allocation3], 128, 128, 8
        $region16: #{tpu_custom_call.1} parent=11 // pred_fallthru
          _
      $region12: #{tpu_custom_call.1} parent=5 // pred_fallthru
        _
      %p167 = scmp.lt.s32.totalorder %s14, 2
      // Predicated region
      $region17: #{tpu_custom_call.1} parent=5 // pred_check
        %p168 = pneg %p167
      $region18: #{tpu_custom_call.1} parent=5 // pred_check_branch
        %170 = sbr.rel (%p168) target = $region20
      $region19: #{tpu_custom_call.1} parent=5 // pred_region
        // Predicated region
        $region21: #{tpu_custom_call.1} parent=19 // pred_check
          %p171 = pneg %p34
        $region22: #{tpu_custom_call.1} parent=19 // pred_check_branch
          %173 = sbr.rel (%p171) target = $region24
        $region23: #{tpu_custom_call.1} parent=19 // pred_region
          %s174 = smul.u32 2, %s14
          %p175 = scmp.lt.s32.totalorder %s174, 3
          %s176 = scalar_select %p175, %s174, 3
          %s177 = smul.addr %s176, 8
          %s178 = scalar_lea.vmem %s0, %s177
          %s179 = smul.u32 2, %s14
        $region24: #{tpu_custom_call.1} parent=19 // pred_fallthru
          _
        // Predicated region
        $region25: #{tpu_custom_call.1} parent=19 // pred_check
          %p180 = pneg %p60
        $region26: #{tpu_custom_call.1} parent=19 // pred_check_branch
          %182 = sbr.rel (%p180) target = $region28
        $region27: #{tpu_custom_call.1} parent=19 // pred_region
          %s183 = smul.u32 2, %s14
          %p184 = scmp.lt.s32.totalorder %s183, 3
          %s185 = scalar_select %p184, %s183, 3
          %s186 = smul.addr %s185, 8
          %s187 = scalar_lea.vmem %s1, %s186
          %s188 = smul.u32 2, %s14
        $region28: #{tpu_custom_call.1} parent=19 // pred_fallthru
          _
        // Predicated region
        $region29: #{tpu_custom_call.1} parent=19 // pred_check
          %p189 = pneg %p86
        $region30: #{tpu_custom_call.1} parent=19 // pred_check_branch
          %191 = sbr.rel (%p189) target = $region32
        $region31: #{tpu_custom_call.1} parent=19 // pred_region
          %s192 = smul.u32 2, %s14
          %p193 = scmp.lt.s32.totalorder %s192, 3
          %s194 = scalar_select %p193, %s192, 3
          %s195 = smul.addr %s194, 8
          %s196 = scalar_lea.vmem %s2, %s195
          %s197 = smul.u32 2, %s14
        $region32: #{tpu_custom_call.1} parent=19 // pred_fallthru
          _
      $region20: #{tpu_custom_call.1} parent=5 // pred_fallthru
        _
      %p198 = scmp.le.s32.totalorder 1, %s14
      %p199 = scmp.lt.s32.totalorder %s14, 3
      %p200 = pnand %p198, %p199
      %p201 = pneg %p200
      // Predicated region
      $region33: #{tpu_custom_call.1} parent=5 // pred_check
        _
      $region34: #{tpu_custom_call.1} parent=5 // pred_check_branch
        %203 = sbr.rel (%p200) target = $region36
      $region35: #{tpu_custom_call.1} parent=5 // pred_region
        %s204 = ssub.s32 %s14, 1
        // Predicated region
        $region37: #{tpu_custom_call.1} parent=35 // pred_check
          %p205 = pneg %p113
        $region38: #{tpu_custom_call.1} parent=35 // pred_check_branch
          %207 = sbr.rel (%p205) target = $region40
        $region39: #{tpu_custom_call.1} parent=35 // pred_region
          %208 = dma.done [#allocation3], 2048
        $region40: #{tpu_custom_call.1} parent=35 // pred_fallthru
          _
        %s209 = smul.u32 2, %s19
        %p210 = scmp.lt.s32.totalorder %s209, 3
        %s211 = scalar_select %p210, %s209, 3
        %s212 = smul.addr %s211, 8
        %s213 = scalar_lea.vmem %s0, %s212
        %p214 = pneg %p40
        %p215 = pneg %p37
        %s216 = smul.u32 2, %s19
        %p217 = scmp.lt.s32.totalorder %s216, 3
        %s218 = scalar_select %p217, %s216, 3
        %s219 = smul.addr %s218, 8
        %s220 = scalar_lea.vmem %s1, %s219
        %p221 = pneg %p66
        %p222 = pneg %p63
        %s223 = smul.u32 2, %s19
        %p224 = scmp.lt.s32.totalorder %s223, 3
        %s225 = scalar_select %p224, %s223, 3
        %s226 = smul.addr %s225, 8
        %s227 = scalar_lea.vmem %s2, %s226
        %p228 = pneg %p92
        %p229 = pneg %p89
        %p230 = pneg %p113
        %p231 = pneg %p110
        %p232 = pneg %p139
        %p233 = pneg %p136
        %s234 = sand.u32 %s126, 1
        %s235 = scalar_lea.sflag [#allocation4], %s234
        %s236 = sand.u32 %s126, 1
        %s237 = scalar_lea.vmem [#allocation5], %s236
        %s238 = smul.u32 2, %s19
        %p239 = scmp.lt.s32.totalorder %s238, 3
        %s240 = scalar_select %p239, %s238, 3
        %s241 = smul.addr %s240, 8
        %s242 = scalar_lea.vmem %s0, %s241
        %s243 = smul.u32 2, %s19
        %s244 = smul.u32 2, %s19
        %p245 = scmp.lt.s32.totalorder %s244, 3
        %s246 = scalar_select %p245, %s244, 3
        %s247 = smul.addr %s246, 8
        %s248 = scalar_lea.vmem %s1, %s247
        %s249 = smul.u32 2, %s19
        %s250 = smul.u32 2, %s19
        %p251 = scmp.lt.s32.totalorder %s250, 3
        %s252 = scalar_select %p251, %s250, 3
        %s253 = smul.addr %s252, 8
        %s254 = scalar_lea.vmem %s2, %s253
        %s255 = smul.u32 2, %s19
        %v256 = vld [vmem:[#allocation2] sm:$0xff]
        %v257 = vld [vmem:[#allocation2 + $0x8] sm:$0xff]
        %v258 = vld [vmem:[#allocation2 + $0x10] sm:$0xff]
        %v259 = vld [vmem:[#allocation2 + $0x18] sm:$0xff]
        %v260 = vld [vmem:[#allocation2 + $0x20] sm:$0xff]
        %v261 = vld [vmem:[#allocation2 + $0x28] sm:$0xff]
        %v262 = vld [vmem:[#allocation2 + $0x30] sm:$0xff]
        %v263 = vld [vmem:[#allocation2 + $0x38] sm:$0xff]
        %v264 = vld [vmem:[#allocation2 + $0x40] sm:$0xff]
        %v265 = vld [vmem:[#allocation2 + $0x48] sm:$0xff]
        %v266 = vld [vmem:[#allocation2 + $0x50] sm:$0xff]
        %v267 = vld [vmem:[#allocation2 + $0x58] sm:$0xff]
        %v268 = vld [vmem:[#allocation2 + $0x60] sm:$0xff]
        %v269 = vld [vmem:[#allocation2 + $0x68] sm:$0xff]
        %v270 = vld [vmem:[#allocation2 + $0x70] sm:$0xff]
        %v271 = vld [vmem:[#allocation2 + $0x78] sm:$0xff]
        %v272 = vld [vmem:[%s242] sm:$0xff]
        %v273 = vld [vmem:[%s242 + $0x8] sm:$0xff]
        %v274 = vld [vmem:[%s248] sm:$0xff]
        %v275 = vld [vmem:[%s248 + $0x8] sm:$0xff]
        %v276 = vld [vmem:[%s254] sm:$0xff]
        %v277 = vld [vmem:[%s254 + $0x8] sm:$0xff]
        %v278 = vlaneseq
        %v279 = vand.u32 %v278, 127
        %280 = vset.pattern.permute.xlu0 0
        %281 = vperm.xlu0 %280, %v272
        %v282 = vpop.permute.xlu0 %281
        %283 = vset.pattern.permute.xlu0 0
        %284 = vperm.xlu0 %283, %v273
        %v285 = vpop.permute.xlu0 %284
        %vm286 = vcmp.eq.s32.totalorder %v282, %v279
        %vm287 = vcmp.eq.s32.totalorder %v285, %v279
        %v288 = vsel %vm286, 1, 0
        %v289 = vsel %vm287, 1, 0
        %v290 = vcvt.s32.f32 %v288
        %v291 = vcvt.s32.f32 %v289
        %292 = vset.pattern.permute.xlu0 0
        %293 = vperm.xlu0 %292, %v274
        %v294 = vpop.permute.xlu0 %293
        %295 = vset.pattern.permute.xlu0 0
        %296 = vperm.xlu0 %295, %v275
        %v297 = vpop.permute.xlu0 %296
        %vm298 = vcmp.eq.s32.totalorder %v294, %v279
        %vm299 = vcmp.eq.s32.totalorder %v297, %v279
        %v300 = vsel %vm298, 1, 0
        %v301 = vsel %vm299, 1, 0
        %v302 = vcvt.s32.f32 %v300
        %v303 = vcvt.s32.f32 %v301
        %v304 = vsub.f32 %v290, %v302
        %v305 = vsub.f32 %v291, %v303
        %306 = vset.pattern.permute.xlu0 0
        %307 = vperm.xlu0 %306, %v276
        %v308 = vpop.permute.xlu0 %307
        %309 = vset.pattern.permute.xlu0 0
        %310 = vperm.xlu0 %309, %v277
        %v311 = vpop.permute.xlu0 %310
        %vm312 = vcmp.eq.s32.totalorder %v308, %v279
        %vm313 = vcmp.eq.s32.totalorder %v311, %v279
        %v314 = vsel %vm312, 1, 0
        %v315 = vsel %vm313, 1, 0
        %v316 = vcvt.s32.f32 %v314
        %v317 = vcvt.s32.f32 %v315
        %v318 = vsub.f32 %v290, %v316
        %v319 = vsub.f32 %v291, %v317
        %320 = vmatprep.subr.mxu0 0.0
        %v321 = vand.u32 %v256, 4294901760
        %322 = vmatpush1.msra.mxu0 %v321
        %323 = vmatprep.subr.mxu0 0.0
        %v324 = vand.u32 %v257, 4294901760
        %325 = vmatpush1.msra.mxu0 %v324
        %326 = vmatprep.subr.mxu0 0.0
        %v327 = vand.u32 %v258, 4294901760
        %328 = vmatpush1.msra.mxu0 %v327
        %329 = vmatprep.subr.mxu0 0.0
        %v330 = vand.u32 %v259, 4294901760
        %331 = vmatpush1.msra.mxu0 %v330
        %332 = vmatprep.subr.mxu0 0.0
        %v333 = vand.u32 %v260, 4294901760
        %334 = vmatpush1.msra.mxu0 %v333
        %335 = vmatprep.subr.mxu0 0.0
        %v336 = vand.u32 %v261, 4294901760
        %337 = vmatpush1.msra.mxu0 %v336
        %338 = vmatprep.subr.mxu0 0.0
        %v339 = vand.u32 %v262, 4294901760
        %340 = vmatpush1.msra.mxu0 %v339
        %341 = vmatprep.subr.mxu0 0.0
        %v342 = vand.u32 %v263, 4294901760
        %343 = vmatpush1.msra.mxu0 %v342
        %344 = vmatprep.subr.mxu0 0.0
        %v345 = vand.u32 %v264, 4294901760
        %346 = vmatpush1.msra.mxu0 %v345
        %347 = vmatprep.subr.mxu0 0.0
        %v348 = vand.u32 %v265, 4294901760
        %349 = vmatpush1.msra.mxu0 %v348
        %350 = vmatprep.subr.mxu0 0.0
        %v351 = vand.u32 %v266, 4294901760
        %352 = vmatpush1.msra.mxu0 %v351
        %353 = vmatprep.subr.mxu0 0.0
        %v354 = vand.u32 %v267, 4294901760
        %355 = vmatpush1.msra.mxu0 %v354
        %356 = vmatprep.subr.mxu0 0.0
        %v357 = vand.u32 %v268, 4294901760
        %358 = vmatpush1.msra.mxu0 %v357
        %359 = vmatprep.subr.mxu0 0.0
        %v360 = vand.u32 %v269, 4294901760
        %361 = vmatpush1.msra.mxu0 %v360
        %362 = vmatprep.subr.mxu0 0.0
        %v363 = vand.u32 %v270, 4294901760
        %364 = vmatpush1.msra.mxu0 %v363
        %365 = vmatprep.subr.mxu0 0.0
        %v366 = vand.u32 %v271, 4294901760
        %367 = vmatpush1.msra.mxu0 %v366
        %368 = vmatprep.subr.mxu0 0.0
        %369 = vmatpush1.msra.mxu0 0.0
        %370 = vmatprep.subr.mxu0 0.0
        %371 = vmatpush1.msra.mxu0 0.0
        %372 = vmatprep.subr.mxu0 0.0
        %373 = vmatpush1.msra.mxu0 0.0
        %374 = vmatprep.subr.mxu0 0.0
        %375 = vmatpush1.msra.mxu0 0.0
        %376 = vmatprep.subr.mxu0 0.0
        %377 = vmatpush1.msra.mxu0 0.0
        %378 = vmatprep.subr.mxu0 0.0
        %379 = vmatpush1.msra.mxu0 0.0
        %380 = vmatprep.subr.mxu0 0.0
        %381 = vmatpush1.msra.mxu0 0.0
        %382 = vmatprep.subr.mxu0 0.0
        %383 = vmatpush1.msra.mxu0 0.0
        %384 = vmatprep.subr.mxu0 0.0
        %385 = vmatpush1.msra.mxu0 0.0
        %386 = vmatprep.subr.mxu0 0.0
        %387 = vmatpush1.msra.mxu0 0.0
        %388 = vmatprep.subr.mxu0 0.0
        %389 = vmatpush1.msra.mxu0 0.0
        %390 = vmatprep.subr.mxu0 0.0
        %391 = vmatpush1.msra.mxu0 0.0
        %392 = vmatprep.subr.mxu0 0.0
        %393 = vmatpush1.msra.mxu0 0.0
        %394 = vmatprep.subr.mxu0 0.0
        %395 = vmatpush1.msra.mxu0 0.0
        %396 = vmatprep.subr.mxu0 0.0
        %397 = vmatpush1.msra.mxu0 0.0
        %398 = vmatprep.subr.mxu0 0.0
        %399 = vmatpush1.msra.mxu0 0.0
        %400 = vmatprep.mubr.f32.mxu0 0.0
        %v401 = vand.u32 %v304, 4294901760
        %v402 = vsub.f32 %v304, %v401
        %v403 = vand.u32 %v402, 4294901760
        %v404 = vsub.f32 %v402, %v403
        %v405 = vand.u32 %v404, 4294901760
        %406 = vmatmul.mubr.f32.gmra.mrb[0].mxu0 %v405
        %v407 = vpop.f32.mrb[0].mxu0
        %v408 = vadd.f32 1e-06, %v407
        %v409 = vpop.f32.mrb[0].mxu0
        %410 = vmatprep.mubr.f32.mxu0 0.0
        %v411 = vand.u32 %v305, 4294901760
        %v412 = vsub.f32 %v305, %v411
        %v413 = vand.u32 %v412, 4294901760
        %v414 = vsub.f32 %v412, %v413
        %v415 = vand.u32 %v414, 4294901760
        %416 = vmatmul.mubr.f32.gmra.mrb[0].mxu0 %v415
        %v417 = vpop.f32.mrb[0].mxu0
        %v418 = vadd.f32 1e-06, %v417
        %v419 = vpop.f32.mrb[0].mxu0
        %420 = vdwg.mxu0
        %421 = vmatprep.subr.mxu0 0.0
        %v422 = vand.u32 %v256, 4294901760
        %v423 = vsub.f32 %v256, %v422
        %v424 = vand.u32 %v423, 4294901760
        %v425 = vsub.f32 %v423, %v424
        %v426 = vand.u32 %v425, 4294901760
        %427 = vmatpush1.msra.mxu0 %v426
        %428 = vmatprep.subr.mxu0 0.0
        %v429 = vand.u32 %v257, 4294901760
        %v430 = vsub.f32 %v257, %v429
        %v431 = vand.u32 %v430, 4294901760
        %v432 = vsub.f32 %v430, %v431
        %v433 = vand.u32 %v432, 4294901760
        %434 = vmatpush1.msra.mxu0 %v433
        %435 = vmatprep.subr.mxu0 0.0
        %v436 = vand.u32 %v258, 4294901760
        %v437 = vsub.f32 %v258, %v436
        %v438 = vand.u32 %v437, 4294901760
        %v439 = vsub.f32 %v437, %v438
        %v440 = vand.u32 %v439, 4294901760
        %441 = vmatpush1.msra.mxu0 %v440
        %442 = vmatprep.subr.mxu0 0.0
        %v443 = vand.u32 %v259, 4294901760
        %v444 = vsub.f32 %v259, %v443
        %v445 = vand.u32 %v444, 4294901760
        %v446 = vsub.f32 %v444, %v445
        %v447 = vand.u32 %v446, 4294901760
        %448 = vmatpush1.msra.mxu0 %v447
        %449 = vmatprep.subr.mxu0 0.0
        %v450 = vand.u32 %v260, 4294901760
        %v451 = vsub.f32 %v260, %v450
        %v452 = vand.u32 %v451, 4294901760
        %v453 = vsub.f32 %v451, %v452
        %v454 = vand.u32 %v453, 4294901760
        %455 = vmatpush1.msra.mxu0 %v454
        %456 = vmatprep.subr.mxu0 0.0
        %v457 = vand.u32 %v261, 4294901760
        %v458 = vsub.f32 %v261, %v457
        %v459 = vand.u32 %v458, 4294901760
        %v460 = vsub.f32 %v458, %v459
        %v461 = vand.u32 %v460, 4294901760
        %462 = vmatpush1.msra.mxu0 %v461
        %463 = vmatprep.subr.mxu0 0.0
        %v464 = vand.u32 %v262, 4294901760
        %v465 = vsub.f32 %v262, %v464
        %v466 = vand.u32 %v465, 4294901760
        %v467 = vsub.f32 %v465, %v466
        %v468 = vand.u32 %v467, 4294901760
        %469 = vmatpush1.msra.mxu0 %v468
        %470 = vmatprep.subr.mxu0 0.0
        %v471 = vand.u32 %v263, 4294901760
        %v472 = vsub.f32 %v263, %v471
        %v473 = vand.u32 %v472, 4294901760
        %v474 = vsub.f32 %v472, %v473
        %v475 = vand.u32 %v474, 4294901760
        %476 = vmatpush1.msra.mxu0 %v475
        %477 = vmatprep.subr.mxu0 0.0
        %v478 = vand.u32 %v264, 4294901760
        %v479 = vsub.f32 %v264, %v478
        %v480 = vand.u32 %v479, 4294901760
        %v481 = vsub.f32 %v479, %v480
        %v482 = vand.u32 %v481, 4294901760
        %483 = vmatpush1.msra.mxu0 %v482
        %484 = vmatprep.subr.mxu0 0.0
        %v485 = vand.u32 %v265, 4294901760
        %v486 = vsub.f32 %v265, %v485
        %v487 = vand.u32 %v486, 4294901760
        %v488 = vsub.f32 %v486, %v487
        %v489 = vand.u32 %v488, 4294901760
        %490 = vmatpush1.msra.mxu0 %v489
        %491 = vmatprep.subr.mxu0 0.0
        %v492 = vand.u32 %v266, 4294901760
        %v493 = vsub.f32 %v266, %v492
        %v494 = vand.u32 %v493, 4294901760
        %v495 = vsub.f32 %v493, %v494
        %v496 = vand.u32 %v495, 4294901760
        %497 = vmatpush1.msra.mxu0 %v496
        %498 = vmatprep.subr.mxu0 0.0
        %v499 = vand.u32 %v267, 4294901760
        %v500 = vsub.f32 %v267, %v499
        %v501 = vand.u32 %v500, 4294901760
        %v502 = vsub.f32 %v500, %v501
        %v503 = vand.u32 %v502, 4294901760
        %504 = vmatpush1.msra.mxu0 %v503
        %505 = vmatprep.subr.mxu0 0.0
        %v506 = vand.u32 %v268, 4294901760
        %v507 = vsub.f32 %v268, %v506
        %v508 = vand.u32 %v507, 4294901760
        %v509 = vsub.f32 %v507, %v508
        %v510 = vand.u32 %v509, 4294901760
        %511 = vmatpush1.msra.mxu0 %v510
        %512 = vmatprep.subr.mxu0 0.0
        %v513 = vand.u32 %v269, 4294901760
        %v514 = vsub.f32 %v269, %v513
        %v515 = vand.u32 %v514, 4294901760
        %v516 = vsub.f32 %v514, %v515
        %v517 = vand.u32 %v516, 4294901760
        %518 = vmatpush1.msra.mxu0 %v517
        %519 = vmatprep.subr.mxu0 0.0
        %v520 = vand.u32 %v270, 4294901760
        %v521 = vsub.f32 %v270, %v520
        %v522 = vand.u32 %v521, 4294901760
        %v523 = vsub.f32 %v521, %v522
        %v524 = vand.u32 %v523, 4294901760
        %525 = vmatpush1.msra.mxu0 %v524
        %526 = vmatprep.subr.mxu0 0.0
        %v527 = vand.u32 %v271, 4294901760
        %v528 = vsub.f32 %v271, %v527
        %v529 = vand.u32 %v528, 4294901760
        %v530 = vsub.f32 %v528, %v529
        %v531 = vand.u32 %v530, 4294901760
        %532 = vmatpush1.msra.mxu0 %v531
        %533 = vmatprep.subr.mxu0 0.0
        %534 = vmatpush1.msra.mxu0 0.0
        %535 = vmatprep.subr.mxu0 0.0
        %536 = vmatpush1.msra.mxu0 0.0
        %537 = vmatprep.subr.mxu0 0.0
        %538 = vmatpush1.msra.mxu0 0.0
        %539 = vmatprep.subr.mxu0 0.0
        %540 = vmatpush1.msra.mxu0 0.0
        %541 = vmatprep.subr.mxu0 0.0
        %542 = vmatpush1.msra.mxu0 0.0
        %543 = vmatprep.subr.mxu0 0.0
        %544 = vmatpush1.msra.mxu0 0.0
        %545 = vmatprep.subr.mxu0 0.0
        %546 = vmatpush1.msra.mxu0 0.0
        %547 = vmatprep.subr.mxu0 0.0
        %548 = vmatpush1.msra.mxu0 0.0
        %549 = vmatprep.subr.mxu0 0.0
        %550 = vmatpush1.msra.mxu0 0.0
        %551 = vmatprep.subr.mxu0 0.0
        %552 = vmatpush1.msra.mxu0 0.0
        %553 = vmatprep.subr.mxu0 0.0
        %554 = vmatpush1.msra.mxu0 0.0
        %555 = vmatprep.subr.mxu0 0.0
        %556 = vmatpush1.msra.mxu0 0.0
        %557 = vmatprep.subr.mxu0 0.0
        %558 = vmatpush1.msra.mxu0 0.0
        %559 = vmatprep.subr.mxu0 0.0
        %560 = vmatpush1.msra.mxu0 0.0
        %561 = vmatprep.subr.mxu0 0.0
        %562 = vmatpush1.msra.mxu0 0.0
        %563 = vmatprep.subr.mxu0 0.0
        %564 = vmatpush1.msra.mxu0 0.0
        %565 = vmatprep.mubr.f32.mxu0 0.0
        %v566 = vand.u32 %v304, 4294901760
        %567 = vmatmul.mubr.f32.gmra.mrb[0].mxu0 %v566
        %v568 = vpop.f32.mrb[0].mxu0
        %v569 = vadd.f32 %v408, %v568
        %v570 = vpop.f32.mrb[0].mxu0
        %571 = vmatprep.mubr.f32.mxu0 0.0
        %v572 = vand.u32 %v305, 4294901760
        %573 = vmatmul.mubr.f32.gmra.mrb[0].mxu0 %v572
        %v574 = vpop.f32.mrb[0].mxu0
        %v575 = vadd.f32 %v418, %v574
        %v576 = vpop.f32.mrb[0].mxu0
        %577 = vdwg.mxu0
        %578 = vmatprep.subr.mxu0 0.0
        %v579 = vand.u32 %v256, 4294901760
        %v580 = vsub.f32 %v256, %v579
        %581 = vmatpush1.msra.mxu0 %v580
        %582 = vmatprep.subr.mxu0 0.0
        %v583 = vand.u32 %v257, 4294901760
        %v584 = vsub.f32 %v257, %v583
        %585 = vmatpush1.msra.mxu0 %v584
        %586 = vmatprep.subr.mxu0 0.0
        %v587 = vand.u32 %v258, 4294901760
        %v588 = vsub.f32 %v258, %v587
        %589 = vmatpush1.msra.mxu0 %v588
        %590 = vmatprep.subr.mxu0 0.0
        %v591 = vand.u32 %v259, 4294901760
        %v592 = vsub.f32 %v259, %v591
        %593 = vmatpush1.msra.mxu0 %v592
        %594 = vmatprep.subr.mxu0 0.0
        %v595 = vand.u32 %v260, 4294901760
        %v596 = vsub.f32 %v260, %v595
        %597 = vmatpush1.msra.mxu0 %v596
        %598 = vmatprep.subr.mxu0 0.0
        %v599 = vand.u32 %v261, 4294901760
        %v600 = vsub.f32 %v261, %v599
        %601 = vmatpush1.msra.mxu0 %v600
        %602 = vmatprep.subr.mxu0 0.0
        %v603 = vand.u32 %v262, 4294901760
        %v604 = vsub.f32 %v262, %v603
        %605 = vmatpush1.msra.mxu0 %v604
        %606 = vmatprep.subr.mxu0 0.0
        %v607 = vand.u32 %v263, 4294901760
        %v608 = vsub.f32 %v263, %v607
        %609 = vmatpush1.msra.mxu0 %v608
        %610 = vmatprep.subr.mxu0 0.0
        %v611 = vand.u32 %v264, 4294901760
        %v612 = vsub.f32 %v264, %v611
        %613 = vmatpush1.msra.mxu0 %v612
        %614 = vmatprep.subr.mxu0 0.0
        %v615 = vand.u32 %v265, 4294901760
        %v616 = vsub.f32 %v265, %v615
        %617 = vmatpush1.msra.mxu0 %v616
        %618 = vmatprep.subr.mxu0 0.0
        %v619 = vand.u32 %v266, 4294901760
        %v620 = vsub.f32 %v266, %v619
        %621 = vmatpush1.msra.mxu0 %v620
        %622 = vmatprep.subr.mxu0 0.0
        %v623 = vand.u32 %v267, 4294901760
        %v624 = vsub.f32 %v267, %v623
        %625 = vmatpush1.msra.mxu0 %v624
        %626 = vmatprep.subr.mxu0 0.0
        %v627 = vand.u32 %v268, 4294901760
        %v628 = vsub.f32 %v268, %v627
        %629 = vmatpush1.msra.mxu0 %v628
        %630 = vmatprep.subr.mxu0 0.0
        %v631 = vand.u32 %v269, 4294901760
        %v632 = vsub.f32 %v269, %v631
        %633 = vmatpush1.msra.mxu0 %v632
        %634 = vmatprep.subr.mxu0 0.0
        %v635 = vand.u32 %v270, 4294901760
        %v636 = vsub.f32 %v270, %v635
        %637 = vmatpush1.msra.mxu0 %v636
        %638 = vmatprep.subr.mxu0 0.0
        %v639 = vand.u32 %v271, 4294901760
        %v640 = vsub.f32 %v271, %v639
        %641 = vmatpush1.msra.mxu0 %v640
        %642 = vmatprep.subr.mxu0 0.0
        %643 = vmatpush1.msra.mxu0 0.0
        %644 = vmatprep.subr.mxu0 0.0
        %645 = vmatpush1.msra.mxu0 0.0
        %646 = vmatprep.subr.mxu0 0.0
        %647 = vmatpush1.msra.mxu0 0.0
        %648 = vmatprep.subr.mxu0 0.0
        %649 = vmatpush1.msra.mxu0 0.0
        %650 = vmatprep.subr.mxu0 0.0
        %651 = vmatpush1.msra.mxu0 0.0
        %652 = vmatprep.subr.mxu0 0.0
        %653 = vmatpush1.msra.mxu0 0.0
        %654 = vmatprep.subr.mxu0 0.0
        %655 = vmatpush1.msra.mxu0 0.0
        %656 = vmatprep.subr.mxu0 0.0
        %657 = vmatpush1.msra.mxu0 0.0
        %658 = vmatprep.subr.mxu0 0.0
        %659 = vmatpush1.msra.mxu0 0.0
        %660 = vmatprep.subr.mxu0 0.0
        %661 = vmatpush1.msra.mxu0 0.0
        %662 = vmatprep.subr.mxu0 0.0
        %663 = vmatpush1.msra.mxu0 0.0
        %664 = vmatprep.subr.mxu0 0.0
        %665 = vmatpush1.msra.mxu0 0.0
        %666 = vmatprep.subr.mxu0 0.0
        %667 = vmatpush1.msra.mxu0 0.0
        %668 = vmatprep.subr.mxu0 0.0
        %669 = vmatpush1.msra.mxu0 0.0
        %670 = vmatprep.subr.mxu0 0.0
        %671 = vmatpush1.msra.mxu0 0.0
        %672 = vmatprep.subr.mxu0 0.0
        %673 = vmatpush1.msra.mxu0 0.0
        %674 = vmatprep.mubr.f32.mxu0 0.0
        %v675 = vand.u32 %v304, 4294901760
        %v676 = vsub.f32 %v304, %v675
        %677 = vmatmul.mubr.f32.gmra.mrb[0].mxu0 %v676
        %v678 = vpop.f32.mrb[0].mxu0
        %v679 = vadd.f32 %v569, %v678
        %v680 = vpop.f32.mrb[0].mxu0
        %681 = vmatprep.mubr.f32.mxu0 0.0
        %v682 = vand.u32 %v305, 4294901760
        %v683 = vsub.f32 %v305, %v682
        %684 = vmatmul.mubr.f32.gmra.mrb[0].mxu0 %v683
        %v685 = vpop.f32.mrb[0].mxu0
        %v686 = vadd.f32 %v575, %v685
        %v687 = vpop.f32.mrb[0].mxu0
        %688 = vdwg.mxu0
        %689 = vmatprep.subr.mxu0 0.0
        %v690 = vand.u32 %v256, 4294901760
        %691 = vmatpush1.msra.mxu0 %v690
        %692 = vmatprep.subr.mxu0 0.0
        %v693 = vand.u32 %v257, 4294901760
        %694 = vmatpush1.msra.mxu0 %v693
        %695 = vmatprep.subr.mxu0 0.0
        %v696 = vand.u32 %v258, 4294901760
        %697 = vmatpush1.msra.mxu0 %v696
        %698 = vmatprep.subr.mxu0 0.0
        %v699 = vand.u32 %v259, 4294901760
        %700 = vmatpush1.msra.mxu0 %v699
        %701 = vmatprep.subr.mxu0 0.0
        %v702 = vand.u32 %v260, 4294901760
        %703 = vmatpush1.msra.mxu0 %v702
        %704 = vmatprep.subr.mxu0 0.0
        %v705 = vand.u32 %v261, 4294901760
        %706 = vmatpush1.msra.mxu0 %v705
        %707 = vmatprep.subr.mxu0 0.0
        %v708 = vand.u32 %v262, 4294901760
        %709 = vmatpush1.msra.mxu0 %v708
        %710 = vmatprep.subr.mxu0 0.0
        %v711 = vand.u32 %v263, 4294901760
        %712 = vmatpush1.msra.mxu0 %v711
        %713 = vmatprep.subr.mxu0 0.0
        %v714 = vand.u32 %v264, 4294901760
        %715 = vmatpush1.msra.mxu0 %v714
        %716 = vmatprep.subr.mxu0 0.0
        %v717 = vand.u32 %v265, 4294901760
        %718 = vmatpush1.msra.mxu0 %v717
        %719 = vmatprep.subr.mxu0 0.0
        %v720 = vand.u32 %v266, 4294901760
        %721 = vmatpush1.msra.mxu0 %v720
        %722 = vmatprep.subr.mxu0 0.0
        %v723 = vand.u32 %v267, 4294901760
        %724 = vmatpush1.msra.mxu0 %v723
        %725 = vmatprep.subr.mxu0 0.0
        %v726 = vand.u32 %v268, 4294901760
        %727 = vmatpush1.msra.mxu0 %v726
        %728 = vmatprep.subr.mxu0 0.0
        %v729 = vand.u32 %v269, 4294901760
        %730 = vmatpush1.msra.mxu0 %v729
        %731 = vmatprep.subr.mxu0 0.0
        %v732 = vand.u32 %v270, 4294901760
        %733 = vmatpush1.msra.mxu0 %v732
        %734 = vmatprep.subr.mxu0 0.0
        %v735 = vand.u32 %v271, 4294901760
        %736 = vmatpush1.msra.mxu0 %v735
        %737 = vmatprep.subr.mxu0 0.0
        %738 = vmatpush1.msra.mxu0 0.0
        %739 = vmatprep.subr.mxu0 0.0
        %740 = vmatpush1.msra.mxu0 0.0
        %741 = vmatprep.subr.mxu0 0.0
        %742 = vmatpush1.msra.mxu0 0.0
        %743 = vmatprep.subr.mxu0 0.0
        %744 = vmatpush1.msra.mxu0 0.0
        %745 = vmatprep.subr.mxu0 0.0
        %746 = vmatpush1.msra.mxu0 0.0
        %747 = vmatprep.subr.mxu0 0.0
        %748 = vmatpush1.msra.mxu0 0.0
        %749 = vmatprep.subr.mxu0 0.0
        %750 = vmatpush1.msra.mxu0 0.0
        %751 = vmatprep.subr.mxu0 0.0
        %752 = vmatpush1.msra.mxu0 0.0
        %753 = vmatprep.subr.mxu0 0.0
        %754 = vmatpush1.msra.mxu0 0.0
        %755 = vmatprep.subr.mxu0 0.0
        %756 = vmatpush1.msra.mxu0 0.0
        %757 = vmatprep.subr.mxu0 0.0
        %758 = vmatpush1.msra.mxu0 0.0
        %759 = vmatprep.subr.mxu0 0.0
        %760 = vmatpush1.msra.mxu0 0.0
        %761 = vmatprep.subr.mxu0 0.0
        %762 = vmatpush1.msra.mxu0 0.0
        %763 = vmatprep.subr.mxu0 0.0
        %764 = vmatpush1.msra.mxu0 0.0
        %765 = vmatprep.subr.mxu0 0.0
        %766 = vmatpush1.msra.mxu0 0.0
        %767 = vmatprep.subr.mxu0 0.0
        %768 = vmatpush1.msra.mxu0 0.0
        %769 = vmatprep.mubr.f32.mxu0 0.0
        %v770 = vand.u32 %v304, 4294901760
        %v771 = vsub.f32 %v304, %v770
        %v772 = vand.u32 %v771, 4294901760
        %773 = vmatmul.mubr.f32.gmra.mrb[0].mxu0 %v772
        %v774 = vpop.f32.mrb[0].mxu0
        %v775 = vadd.f32 %v679, %v774
        %v776 = vpop.f32.mrb[0].mxu0
        %777 = vmatprep.mubr.f32.mxu0 0.0
        %v778 = vand.u32 %v305, 4294901760
        %v779 = vsub.f32 %v305, %v778
        %v780 = vand.u32 %v779, 4294901760
        %781 = vmatmul.mubr.f32.gmra.mrb[0].mxu0 %v780
        %v782 = vpop.f32.mrb[0].mxu0
        %v783 = vadd.f32 %v686, %v782
        %v784 = vpop.f32.mrb[0].mxu0
        %785 = vdwg.mxu0
        %786 = vmatprep.subr.mxu0 0.0
        %v787 = vand.u32 %v256, 4294901760
        %v788 = vsub.f32 %v256, %v787
        %v789 = vand.u32 %v788, 4294901760
        %790 = vmatpush1.msra.mxu0 %v789
        %791 = vmatprep.subr.mxu0 0.0
        %v792 = vand.u32 %v257, 4294901760
        %v793 = vsub.f32 %v257, %v792
        %v794 = vand.u32 %v793, 4294901760
        %795 = vmatpush1.msra.mxu0 %v794
        %796 = vmatprep.subr.mxu0 0.0
        %v797 = vand.u32 %v258, 4294901760
        %v798 = vsub.f32 %v258, %v797
        %v799 = vand.u32 %v798, 4294901760
        %800 = vmatpush1.msra.mxu0 %v799
        %801 = vmatprep.subr.mxu0 0.0
        %v802 = vand.u32 %v259, 4294901760
        %v803 = vsub.f32 %v259, %v802
        %v804 = vand.u32 %v803, 4294901760
        %805 = vmatpush1.msra.mxu0 %v804
        %806 = vmatprep.subr.mxu0 0.0
        %v807 = vand.u32 %v260, 4294901760
        %v808 = vsub.f32 %v260, %v807
        %v809 = vand.u32 %v808, 4294901760
        %810 = vmatpush1.msra.mxu0 %v809
        %811 = vmatprep.subr.mxu0 0.0
        %v812 = vand.u32 %v261, 4294901760
        %v813 = vsub.f32 %v261, %v812
        %v814 = vand.u32 %v813, 4294901760
        %815 = vmatpush1.msra.mxu0 %v814
        %816 = vmatprep.subr.mxu0 0.0
        %v817 = vand.u32 %v262, 4294901760
        %v818 = vsub.f32 %v262, %v817
        %v819 = vand.u32 %v818, 4294901760
        %820 = vmatpush1.msra.mxu0 %v819
        %821 = vmatprep.subr.mxu0 0.0
        %v822 = vand.u32 %v263, 4294901760
        %v823 = vsub.f32 %v263, %v822
        %v824 = vand.u32 %v823, 4294901760
        %825 = vmatpush1.msra.mxu0 %v824
        %826 = vmatprep.subr.mxu0 0.0
        %v827 = vand.u32 %v264, 4294901760
        %v828 = vsub.f32 %v264, %v827
        %v829 = vand.u32 %v828, 4294901760
        %830 = vmatpush1.msra.mxu0 %v829
        %831 = vmatprep.subr.mxu0 0.0
        %v832 = vand.u32 %v265, 4294901760
        %v833 = vsub.f32 %v265, %v832
        %v834 = vand.u32 %v833, 4294901760
        %835 = vmatpush1.msra.mxu0 %v834
        %836 = vmatprep.subr.mxu0 0.0
        %v837 = vand.u32 %v266, 4294901760
        %v838 = vsub.f32 %v266, %v837
        %v839 = vand.u32 %v838, 4294901760
        %840 = vmatpush1.msra.mxu0 %v839
        %841 = vmatprep.subr.mxu0 0.0
        %v842 = vand.u32 %v267, 4294901760
        %v843 = vsub.f32 %v267, %v842
        %v844 = vand.u32 %v843, 4294901760
        %845 = vmatpush1.msra.mxu0 %v844
        %846 = vmatprep.subr.mxu0 0.0
        %v847 = vand.u32 %v268, 4294901760
        %v848 = vsub.f32 %v268, %v847
        %v849 = vand.u32 %v848, 4294901760
        %850 = vmatpush1.msra.mxu0 %v849
        %851 = vmatprep.subr.mxu0 0.0
        %v852 = vand.u32 %v269, 4294901760
        %v853 = vsub.f32 %v269, %v852
        %v854 = vand.u32 %v853, 4294901760
        %855 = vmatpush1.msra.mxu0 %v854
        %856 = vmatprep.subr.mxu0 0.0
        %v857 = vand.u32 %v270, 4294901760
        %v858 = vsub.f32 %v270, %v857
        %v859 = vand.u32 %v858, 4294901760
        %860 = vmatpush1.msra.mxu0 %v859
        %861 = vmatprep.subr.mxu0 0.0
        %v862 = vand.u32 %v271, 4294901760
        %v863 = vsub.f32 %v271, %v862
        %v864 = vand.u32 %v863, 4294901760
        %865 = vmatpush1.msra.mxu0 %v864
        %866 = vmatprep.subr.mxu0 0.0
        %867 = vmatpush1.msra.mxu0 0.0
        %868 = vmatprep.subr.mxu0 0.0
        %869 = vmatpush1.msra.mxu0 0.0
        %870 = vmatprep.subr.mxu0 0.0
        %871 = vmatpush1.msra.mxu0 0.0
        %872 = vmatprep.subr.mxu0 0.0
        %873 = vmatpush1.msra.mxu0 0.0
        %874 = vmatprep.subr.mxu0 0.0
        %875 = vmatpush1.msra.mxu0 0.0
        %876 = vmatprep.subr.mxu0 0.0
        %877 = vmatpush1.msra.mxu0 0.0
        %878 = vmatprep.subr.mxu0 0.0
        %879 = vmatpush1.msra.mxu0 0.0
        %880 = vmatprep.subr.mxu0 0.0
        %881 = vmatpush1.msra.mxu0 0.0
        %882 = vmatprep.subr.mxu0 0.0
        %883 = vmatpush1.msra.mxu0 0.0
        %884 = vmatprep.subr.mxu0 0.0
        %885 = vmatpush1.msra.mxu0 0.0
        %886 = vmatprep.subr.mxu0 0.0
        %887 = vmatpush1.msra.mxu0 0.0
        %888 = vmatprep.subr.mxu0 0.0
        %889 = vmatpush1.msra.mxu0 0.0
        %890 = vmatprep.subr.mxu0 0.0
        %891 = vmatpush1.msra.mxu0 0.0
        %892 = vmatprep.subr.mxu0 0.0
        %893 = vmatpush1.msra.mxu0 0.0
        %894 = vmatprep.subr.mxu0 0.0
        %895 = vmatpush1.msra.mxu0 0.0
        %896 = vmatprep.subr.mxu0 0.0
        %897 = vmatpush1.msra.mxu0 0.0
        %898 = vmatprep.mubr.f32.mxu0 0.0
        %v899 = vand.u32 %v304, 4294901760
        %900 = vmatmul.mubr.f32.gmra.mrb[0].mxu0 %v899
        %v901 = vpop.f32.mrb[0].mxu0
        %v902 = vadd.f32 %v775, %v901
        %v903 = vpop.f32.mrb[0].mxu0
        %904 = vmatprep.mubr.f32.mxu0 0.0
        %v905 = vand.u32 %v305, 4294901760
        %906 = vmatmul.mubr.f32.gmra.mrb[0].mxu0 %v905
        %v907 = vpop.f32.mrb[0].mxu0
        %v908 = vadd.f32 %v783, %v907
        %v909 = vpop.f32.mrb[0].mxu0
        %910 = vdwg.mxu0
        %911 = vmatprep.subr.mxu0 0.0
        %v912 = vand.u32 %v256, 4294901760
        %913 = vmatpush1.msra.mxu0 %v912
        %914 = vmatprep.subr.mxu0 0.0
        %v915 = vand.u32 %v257, 4294901760
        %916 = vmatpush1.msra.mxu0 %v915
        %917 = vmatprep.subr.mxu0 0.0
        %v918 = vand.u32 %v258, 4294901760
        %919 = vmatpush1.msra.mxu0 %v918
        %920 = vmatprep.subr.mxu0 0.0
        %v921 = vand.u32 %v259, 4294901760
        %922 = vmatpush1.msra.mxu0 %v921
        %923 = vmatprep.subr.mxu0 0.0
        %v924 = vand.u32 %v260, 4294901760
        %925 = vmatpush1.msra.mxu0 %v924
        %926 = vmatprep.subr.mxu0 0.0
        %v927 = vand.u32 %v261, 4294901760
        %928 = vmatpush1.msra.mxu0 %v927
        %929 = vmatprep.subr.mxu0 0.0
        %v930 = vand.u32 %v262, 4294901760
        %931 = vmatpush1.msra.mxu0 %v930
        %932 = vmatprep.subr.mxu0 0.0
        %v933 = vand.u32 %v263, 4294901760
        %934 = vmatpush1.msra.mxu0 %v933
        %935 = vmatprep.subr.mxu0 0.0
        %v936 = vand.u32 %v264, 4294901760
        %937 = vmatpush1.msra.mxu0 %v936
        %938 = vmatprep.subr.mxu0 0.0
        %v939 = vand.u32 %v265, 4294901760
        %940 = vmatpush1.msra.mxu0 %v939
        %941 = vmatprep.subr.mxu0 0.0
        %v942 = vand.u32 %v266, 4294901760
        %943 = vmatpush1.msra.mxu0 %v942
        %944 = vmatprep.subr.mxu0 0.0
        %v945 = vand.u32 %v267, 4294901760
        %946 = vmatpush1.msra.mxu0 %v945
        %947 = vmatprep.subr.mxu0 0.0
        %v948 = vand.u32 %v268, 4294901760
        %949 = vmatpush1.msra.mxu0 %v948
        %950 = vmatprep.subr.mxu0 0.0
        %v951 = vand.u32 %v269, 4294901760
        %952 = vmatpush1.msra.mxu0 %v951
        %953 = vmatprep.subr.mxu0 0.0
        %v954 = vand.u32 %v270, 4294901760
        %955 = vmatpush1.msra.mxu0 %v954
        %956 = vmatprep.subr.mxu0 0.0
        %v957 = vand.u32 %v271, 4294901760
        %958 = vmatpush1.msra.mxu0 %v957
        %959 = vmatprep.subr.mxu0 0.0
        %960 = vmatpush1.msra.mxu0 0.0
        %961 = vmatprep.subr.mxu0 0.0
        %962 = vmatpush1.msra.mxu0 0.0
        %963 = vmatprep.subr.mxu0 0.0
        %964 = vmatpush1.msra.mxu0 0.0
        %965 = vmatprep.subr.mxu0 0.0
        %966 = vmatpush1.msra.mxu0 0.0
        %967 = vmatprep.subr.mxu0 0.0
        %968 = vmatpush1.msra.mxu0 0.0
        %969 = vmatprep.subr.mxu0 0.0
        %970 = vmatpush1.msra.mxu0 0.0
        %971 = vmatprep.subr.mxu0 0.0
        %972 = vmatpush1.msra.mxu0 0.0
        %973 = vmatprep.subr.mxu0 0.0
        %974 = vmatpush1.msra.mxu0 0.0
        %975 = vmatprep.subr.mxu0 0.0
        %976 = vmatpush1.msra.mxu0 0.0
        %977 = vmatprep.subr.mxu0 0.0
        %978 = vmatpush1.msra.mxu0 0.0
        %979 = vmatprep.subr.mxu0 0.0
        %980 = vmatpush1.msra.mxu0 0.0
        %981 = vmatprep.subr.mxu0 0.0
        %982 = vmatpush1.msra.mxu0 0.0
        %983 = vmatprep.subr.mxu0 0.0
        %984 = vmatpush1.msra.mxu0 0.0
        %985 = vmatprep.subr.mxu0 0.0
        %986 = vmatpush1.msra.mxu0 0.0
        %987 = vmatprep.subr.mxu0 0.0
        %988 = vmatpush1.msra.mxu0 0.0
        %989 = vmatprep.subr.mxu0 0.0
        %990 = vmatpush1.msra.mxu0 0.0
        %991 = vmatprep.mubr.f32.mxu0 0.0
        %v992 = vand.u32 %v304, 4294901760
        %993 = vmatmul.mubr.f32.gmra.mrb[0].mxu0 %v992
        %v994 = vpop.f32.mrb[0].mxu0
        %v995 = vadd.f32 %v902, %v994
        %v996 = vpop.f32.mrb[0].mxu0
        %997 = vmatprep.mubr.f32.mxu0 0.0
        %v998 = vand.u32 %v305, 4294901760
        %999 = vmatmul.mubr.f32.gmra.mrb[0].mxu0 %v998
        %v1000 = vpop.f32.mrb[0].mxu0
        %v1001 = vadd.f32 %v908, %v1000
        %v1002 = vpop.f32.mrb[0].mxu0
        %1003 = vdwg.mxu0
        %1004 = vmatprep.subr.mxu0 0.0
        %v1005 = vand.u32 %v256, 4294901760
        %1006 = vmatpush1.msra.mxu0 %v1005
        %1007 = vmatprep.subr.mxu0 0.0
        %v1008 = vand.u32 %v257, 4294901760
        %1009 = vmatpush1.msra.mxu0 %v1008
        %1010 = vmatprep.subr.mxu0 0.0
        %v1011 = vand.u32 %v258, 4294901760
        %1012 = vmatpush1.msra.mxu0 %v1011
        %1013 = vmatprep.subr.mxu0 0.0
        %v1014 = vand.u32 %v259, 4294901760
        %1015 = vmatpush1.msra.mxu0 %v1014
        %1016 = vmatprep.subr.mxu0 0.0
        %v1017 = vand.u32 %v260, 4294901760
        %1018 = vmatpush1.msra.mxu0 %v1017
        %1019 = vmatprep.subr.mxu0 0.0
        %v1020 = vand.u32 %v261, 4294901760
        %1021 = vmatpush1.msra.mxu0 %v1020
        %1022 = vmatprep.subr.mxu0 0.0
        %v1023 = vand.u32 %v262, 4294901760
        %1024 = vmatpush1.msra.mxu0 %v1023
        %1025 = vmatprep.subr.mxu0 0.0
        %v1026 = vand.u32 %v263, 4294901760
        %1027 = vmatpush1.msra.mxu0 %v1026
        %1028 = vmatprep.subr.mxu0 0.0
        %v1029 = vand.u32 %v264, 4294901760
        %1030 = vmatpush1.msra.mxu0 %v1029
        %1031 = vmatprep.subr.mxu0 0.0
        %v1032 = vand.u32 %v265, 4294901760
        %1033 = vmatpush1.msra.mxu0 %v1032
        %1034 = vmatprep.subr.mxu0 0.0
        %v1035 = vand.u32 %v266, 4294901760
        %1036 = vmatpush1.msra.mxu0 %v1035
        %1037 = vmatprep.subr.mxu0 0.0
        %v1038 = vand.u32 %v267, 4294901760
        %1039 = vmatpush1.msra.mxu0 %v1038
        %1040 = vmatprep.subr.mxu0 0.0
        %v1041 = vand.u32 %v268, 4294901760
        %1042 = vmatpush1.msra.mxu0 %v1041
        %1043 = vmatprep.subr.mxu0 0.0
        %v1044 = vand.u32 %v269, 4294901760
        %1045 = vmatpush1.msra.mxu0 %v1044
        %1046 = vmatprep.subr.mxu0 0.0
        %v1047 = vand.u32 %v270, 4294901760
        %1048 = vmatpush1.msra.mxu0 %v1047
        %1049 = vmatprep.subr.mxu0 0.0
        %v1050 = vand.u32 %v271, 4294901760
        %1051 = vmatpush1.msra.mxu0 %v1050
        %1052 = vmatprep.subr.mxu0 0.0
        %1053 = vmatpush1.msra.mxu0 0.0
        %1054 = vmatprep.subr.mxu0 0.0
        %1055 = vmatpush1.msra.mxu0 0.0
        %1056 = vmatprep.subr.mxu0 0.0
        %1057 = vmatpush1.msra.mxu0 0.0
        %1058 = vmatprep.subr.mxu0 0.0
        %1059 = vmatpush1.msra.mxu0 0.0
        %1060 = vmatprep.subr.mxu0 0.0
        %1061 = vmatpush1.msra.mxu0 0.0
        %1062 = vmatprep.subr.mxu0 0.0
        %1063 = vmatpush1.msra.mxu0 0.0
        %1064 = vmatprep.subr.mxu0 0.0
        %1065 = vmatpush1.msra.mxu0 0.0
        %1066 = vmatprep.subr.mxu0 0.0
        %1067 = vmatpush1.msra.mxu0 0.0
        %1068 = vmatprep.subr.mxu0 0.0
        %1069 = vmatpush1.msra.mxu0 0.0
        %1070 = vmatprep.subr.mxu0 0.0
        %1071 = vmatpush1.msra.mxu0 0.0
        %1072 = vmatprep.subr.mxu0 0.0
        %1073 = vmatpush1.msra.mxu0 0.0
        %1074 = vmatprep.subr.mxu0 0.0
        %1075 = vmatpush1.msra.mxu0 0.0
        %1076 = vmatprep.subr.mxu0 0.0
        %1077 = vmatpush1.msra.mxu0 0.0
        %1078 = vmatprep.subr.mxu0 0.0
        %1079 = vmatpush1.msra.mxu0 0.0
        %1080 = vmatprep.subr.mxu0 0.0
        %1081 = vmatpush1.msra.mxu0 0.0
        %1082 = vmatprep.subr.mxu0 0.0
        %1083 = vmatpush1.msra.mxu0 0.0
        %1084 = vmatprep.mubr.f32.mxu0 0.0
        %v1085 = vand.u32 %v318, 4294901760
        %v1086 = vsub.f32 %v318, %v1085
        %v1087 = vand.u32 %v1086, 4294901760
        %v1088 = vsub.f32 %v1086, %v1087
        %v1089 = vand.u32 %v1088, 4294901760
        %1090 = vmatmul.mubr.f32.gmra.mrb[0].mxu0 %v1089
        %v1091 = vpop.f32.mrb[0].mxu0
        %v1092 = vadd.f32 1e-06, %v1091
        %v1093 = vpop.f32.mrb[0].mxu0
        %1094 = vmatprep.mubr.f32.mxu0 0.0
        %v1095 = vand.u32 %v319, 4294901760
        %v1096 = vsub.f32 %v319, %v1095
        %v1097 = vand.u32 %v1096, 4294901760
        %v1098 = vsub.f32 %v1096, %v1097
        %v1099 = vand.u32 %v1098, 4294901760
        %1100 = vmatmul.mubr.f32.gmra.mrb[0].mxu0 %v1099
        %v1101 = vpop.f32.mrb[0].mxu0
        %v1102 = vadd.f32 1e-06, %v1101
        %v1103 = vpop.f32.mrb[0].mxu0
        %1104 = vdwg.mxu0
        %1105 = vmatprep.subr.mxu0 0.0
        %v1106 = vand.u32 %v256, 4294901760
        %v1107 = vsub.f32 %v256, %v1106
        %v1108 = vand.u32 %v1107, 4294901760
        %v1109 = vsub.f32 %v1107, %v1108
        %v1110 = vand.u32 %v1109, 4294901760
        %1111 = vmatpush1.msra.mxu0 %v1110
        %1112 = vmatprep.subr.mxu0 0.0
        %v1113 = vand.u32 %v257, 4294901760
        %v1114 = vsub.f32 %v257, %v1113
        %v1115 = vand.u32 %v1114, 4294901760
        %v1116 = vsub.f32 %v1114, %v1115
        %v1117 = vand.u32 %v1116, 4294901760
        %1118 = vmatpush1.msra.mxu0 %v1117
        %1119 = vmatprep.subr.mxu0 0.0
        %v1120 = vand.u32 %v258, 4294901760
        %v1121 = vsub.f32 %v258, %v1120
        %v1122 = vand.u32 %v1121, 4294901760
        %v1123 = vsub.f32 %v1121, %v1122
        %v1124 = vand.u32 %v1123, 4294901760
        %1125 = vmatpush1.msra.mxu0 %v1124
        %1126 = vmatprep.subr.mxu0 0.0
        %v1127 = vand.u32 %v259, 4294901760
        %v1128 = vsub.f32 %v259, %v1127
        %v1129 = vand.u32 %v1128, 4294901760
        %v1130 = vsub.f32 %v1128, %v1129
        %v1131 = vand.u32 %v1130, 4294901760
        %1132 = vmatpush1.msra.mxu0 %v1131
        %1133 = vmatprep.subr.mxu0 0.0
        %v1134 = vand.u32 %v260, 4294901760
        %v1135 = vsub.f32 %v260, %v1134
        %v1136 = vand.u32 %v1135, 4294901760
        %v1137 = vsub.f32 %v1135, %v1136
        %v1138 = vand.u32 %v1137, 4294901760
        %1139 = vmatpush1.msra.mxu0 %v1138
        %1140 = vmatprep.subr.mxu0 0.0
        %v1141 = vand.u32 %v261, 4294901760
        %v1142 = vsub.f32 %v261, %v1141
        %v1143 = vand.u32 %v1142, 4294901760
        %v1144 = vsub.f32 %v1142, %v1143
        %v1145 = vand.u32 %v1144, 4294901760
        %1146 = vmatpush1.msra.mxu0 %v1145
        %1147 = vmatprep.subr.mxu0 0.0
        %v1148 = vand.u32 %v262, 4294901760
        %v1149 = vsub.f32 %v262, %v1148
        %v1150 = vand.u32 %v1149, 4294901760
        %v1151 = vsub.f32 %v1149, %v1150
        %v1152 = vand.u32 %v1151, 4294901760
        %1153 = vmatpush1.msra.mxu0 %v1152
        %1154 = vmatprep.subr.mxu0 0.0
        %v1155 = vand.u32 %v263, 4294901760
        %v1156 = vsub.f32 %v263, %v1155
        %v1157 = vand.u32 %v1156, 4294901760
        %v1158 = vsub.f32 %v1156, %v1157
        %v1159 = vand.u32 %v1158, 4294901760
        %1160 = vmatpush1.msra.mxu0 %v1159
        %1161 = vmatprep.subr.mxu0 0.0
        %v1162 = vand.u32 %v264, 4294901760
        %v1163 = vsub.f32 %v264, %v1162
        %v1164 = vand.u32 %v1163, 4294901760
        %v1165 = vsub.f32 %v1163, %v1164
        %v1166 = vand.u32 %v1165, 4294901760
        %1167 = vmatpush1.msra.mxu0 %v1166
        %1168 = vmatprep.subr.mxu0 0.0
        %v1169 = vand.u32 %v265, 4294901760
        %v1170 = vsub.f32 %v265, %v1169
        %v1171 = vand.u32 %v1170, 4294901760
        %v1172 = vsub.f32 %v1170, %v1171
        %v1173 = vand.u32 %v1172, 4294901760
        %1174 = vmatpush1.msra.mxu0 %v1173
        %1175 = vmatprep.subr.mxu0 0.0
        %v1176 = vand.u32 %v266, 4294901760
        %v1177 = vsub.f32 %v266, %v1176
        %v1178 = vand.u32 %v1177, 4294901760
        %v1179 = vsub.f32 %v1177, %v1178
        %v1180 = vand.u32 %v1179, 4294901760
        %1181 = vmatpush1.msra.mxu0 %v1180
        %1182 = vmatprep.subr.mxu0 0.0
        %v1183 = vand.u32 %v267, 4294901760
        %v1184 = vsub.f32 %v267, %v1183
        %v1185 = vand.u32 %v1184, 4294901760
        %v1186 = vsub.f32 %v1184, %v1185
        %v1187 = vand.u32 %v1186, 4294901760
        %1188 = vmatpush1.msra.mxu0 %v1187
        %1189 = vmatprep.subr.mxu0 0.0
        %v1190 = vand.u32 %v268, 4294901760
        %v1191 = vsub.f32 %v268, %v1190
        %v1192 = vand.u32 %v1191, 4294901760
        %v1193 = vsub.f32 %v1191, %v1192
        %v1194 = vand.u32 %v1193, 4294901760
        %1195 = vmatpush1.msra.mxu0 %v1194
        %1196 = vmatprep.subr.mxu0 0.0
        %v1197 = vand.u32 %v269, 4294901760
        %v1198 = vsub.f32 %v269, %v1197
        %v1199 = vand.u32 %v1198, 4294901760
        %v1200 = vsub.f32 %v1198, %v1199
        %v1201 = vand.u32 %v1200, 4294901760
        %1202 = vmatpush1.msra.mxu0 %v1201
        %1203 = vmatprep.subr.mxu0 0.0
        %v1204 = vand.u32 %v270, 4294901760
        %v1205 = vsub.f32 %v270, %v1204
        %v1206 = vand.u32 %v1205, 4294901760
        %v1207 = vsub.f32 %v1205, %v1206
        %v1208 = vand.u32 %v1207, 4294901760
        %1209 = vmatpush1.msra.mxu0 %v1208
        %1210 = vmatprep.subr.mxu0 0.0
        %v1211 = vand.u32 %v271, 4294901760
        %v1212 = vsub.f32 %v271, %v1211
        %v1213 = vand.u32 %v1212, 4294901760
        %v1214 = vsub.f32 %v1212, %v1213
        %v1215 = vand.u32 %v1214, 4294901760
        %1216 = vmatpush1.msra.mxu0 %v1215
        %1217 = vmatprep.subr.mxu0 0.0
        %1218 = vmatpush1.msra.mxu0 0.0
        %1219 = vmatprep.subr.mxu0 0.0
        %1220 = vmatpush1.msra.mxu0 0.0
        %1221 = vmatprep.subr.mxu0 0.0
        %1222 = vmatpush1.msra.mxu0 0.0
        %1223 = vmatprep.subr.mxu0 0.0
        %1224 = vmatpush1.msra.mxu0 0.0
        %1225 = vmatprep.subr.mxu0 0.0
        %1226 = vmatpush1.msra.mxu0 0.0
        %1227 = vmatprep.subr.mxu0 0.0
        %1228 = vmatpush1.msra.mxu0 0.0
        %1229 = vmatprep.subr.mxu0 0.0
        %1230 = vmatpush1.msra.mxu0 0.0
        %1231 = vmatprep.subr.mxu0 0.0
        %1232 = vmatpush1.msra.mxu0 0.0
        %1233 = vmatprep.subr.mxu0 0.0
        %1234 = vmatpush1.msra.mxu0 0.0
        %1235 = vmatprep.subr.mxu0 0.0
        %1236 = vmatpush1.msra.mxu0 0.0
        %1237 = vmatprep.subr.mxu0 0.0
        %1238 = vmatpush1.msra.mxu0 0.0
        %1239 = vmatprep.subr.mxu0 0.0
        %1240 = vmatpush1.msra.mxu0 0.0
        %1241 = vmatprep.subr.mxu0 0.0
        %1242 = vmatpush1.msra.mxu0 0.0
        %1243 = vmatprep.subr.mxu0 0.0
        %1244 = vmatpush1.msra.mxu0 0.0
        %1245 = vmatprep.subr.mxu0 0.0
        %1246 = vmatpush1.msra.mxu0 0.0
        %1247 = vmatprep.subr.mxu0 0.0
        %1248 = vmatpush1.msra.mxu0 0.0
        %1249 = vmatprep.mubr.f32.mxu0 0.0
        %v1250 = vand.u32 %v318, 4294901760
        %1251 = vmatmul.mubr.f32.gmra.mrb[0].mxu0 %v1250
        %v1252 = vpop.f32.mrb[0].mxu0
        %v1253 = vadd.f32 %v1092, %v1252
        %v1254 = vpop.f32.mrb[0].mxu0
        %1255 = vmatprep.mubr.f32.mxu0 0.0
        %v1256 = vand.u32 %v319, 4294901760
        %1257 = vmatmul.mubr.f32.gmra.mrb[0].mxu0 %v1256
        %v1258 = vpop.f32.mrb[0].mxu0
        %v1259 = vadd.f32 %v1102, %v1258
        %v1260 = vpop.f32.mrb[0].mxu0
        %1261 = vdwg.mxu0
        %1262 = vmatprep.subr.mxu0 0.0
        %v1263 = vand.u32 %v256, 4294901760
        %v1264 = vsub.f32 %v256, %v1263
        %1265 = vmatpush1.msra.mxu0 %v1264
        %1266 = vmatprep.subr.mxu0 0.0
        %v1267 = vand.u32 %v257, 4294901760
        %v1268 = vsub.f32 %v257, %v1267
        %1269 = vmatpush1.msra.mxu0 %v1268
        %1270 = vmatprep.subr.mxu0 0.0
        %v1271 = vand.u32 %v258, 4294901760
        %v1272 = vsub.f32 %v258, %v1271
        %1273 = vmatpush1.msra.mxu0 %v1272
        %1274 = vmatprep.subr.mxu0 0.0
        %v1275 = vand.u32 %v259, 4294901760
        %v1276 = vsub.f32 %v259, %v1275
        %1277 = vmatpush1.msra.mxu0 %v1276
        %1278 = vmatprep.subr.mxu0 0.0
        %v1279 = vand.u32 %v260, 4294901760
        %v1280 = vsub.f32 %v260, %v1279
        %1281 = vmatpush1.msra.mxu0 %v1280
        %1282 = vmatprep.subr.mxu0 0.0
        %v1283 = vand.u32 %v261, 4294901760
        %v1284 = vsub.f32 %v261, %v1283
        %1285 = vmatpush1.msra.mxu0 %v1284
        %1286 = vmatprep.subr.mxu0 0.0
        %v1287 = vand.u32 %v262, 4294901760
        %v1288 = vsub.f32 %v262, %v1287
        %1289 = vmatpush1.msra.mxu0 %v1288
        %1290 = vmatprep.subr.mxu0 0.0
        %v1291 = vand.u32 %v263, 4294901760
        %v1292 = vsub.f32 %v263, %v1291
        %1293 = vmatpush1.msra.mxu0 %v1292
        %1294 = vmatprep.subr.mxu0 0.0
        %v1295 = vand.u32 %v264, 4294901760
        %v1296 = vsub.f32 %v264, %v1295
        %1297 = vmatpush1.msra.mxu0 %v1296
        %1298 = vmatprep.subr.mxu0 0.0
        %v1299 = vand.u32 %v265, 4294901760
        %v1300 = vsub.f32 %v265, %v1299
        %1301 = vmatpush1.msra.mxu0 %v1300
        %1302 = vmatprep.subr.mxu0 0.0
        %v1303 = vand.u32 %v266, 4294901760
        %v1304 = vsub.f32 %v266, %v1303
        %1305 = vmatpush1.msra.mxu0 %v1304
        %1306 = vmatprep.subr.mxu0 0.0
        %v1307 = vand.u32 %v267, 4294901760
        %v1308 = vsub.f32 %v267, %v1307
        %1309 = vmatpush1.msra.mxu0 %v1308
        %1310 = vmatprep.subr.mxu0 0.0
        %v1311 = vand.u32 %v268, 4294901760
        %v1312 = vsub.f32 %v268, %v1311
        %1313 = vmatpush1.msra.mxu0 %v1312
        %1314 = vmatprep.subr.mxu0 0.0
        %v1315 = vand.u32 %v269, 4294901760
        %v1316 = vsub.f32 %v269, %v1315
        %1317 = vmatpush1.msra.mxu0 %v1316
        %1318 = vmatprep.subr.mxu0 0.0
        %v1319 = vand.u32 %v270, 4294901760
        %v1320 = vsub.f32 %v270, %v1319
        %1321 = vmatpush1.msra.mxu0 %v1320
        %1322 = vmatprep.subr.mxu0 0.0
        %v1323 = vand.u32 %v271, 4294901760
        %v1324 = vsub.f32 %v271, %v1323
        %1325 = vmatpush1.msra.mxu0 %v1324
        %1326 = vmatprep.subr.mxu0 0.0
        %1327 = vmatpush1.msra.mxu0 0.0
        %1328 = vmatprep.subr.mxu0 0.0
        %1329 = vmatpush1.msra.mxu0 0.0
        %1330 = vmatprep.subr.mxu0 0.0
        %1331 = vmatpush1.msra.mxu0 0.0
        %1332 = vmatprep.subr.mxu0 0.0
        %1333 = vmatpush1.msra.mxu0 0.0
        %1334 = vmatprep.subr.mxu0 0.0
        %1335 = vmatpush1.msra.mxu0 0.0
        %1336 = vmatprep.subr.mxu0 0.0
        %1337 = vmatpush1.msra.mxu0 0.0
        %1338 = vmatprep.subr.mxu0 0.0
        %1339 = vmatpush1.msra.mxu0 0.0
        %1340 = vmatprep.subr.mxu0 0.0
        %1341 = vmatpush1.msra.mxu0 0.0
        %1342 = vmatprep.subr.mxu0 0.0
        %1343 = vmatpush1.msra.mxu0 0.0
        %1344 = vmatprep.subr.mxu0 0.0
        %1345 = vmatpush1.msra.mxu0 0.0
        %1346 = vmatprep.subr.mxu0 0.0
        %1347 = vmatpush1.msra.mxu0 0.0
        %1348 = vmatprep.subr.mxu0 0.0
        %1349 = vmatpush1.msra.mxu0 0.0
        %1350 = vmatprep.subr.mxu0 0.0
        %1351 = vmatpush1.msra.mxu0 0.0
        %1352 = vmatprep.subr.mxu0 0.0
        %1353 = vmatpush1.msra.mxu0 0.0
        %1354 = vmatprep.subr.mxu0 0.0
        %1355 = vmatpush1.msra.mxu0 0.0
        %1356 = vmatprep.subr.mxu0 0.0
        %1357 = vmatpush1.msra.mxu0 0.0
        %1358 = vmatprep.mubr.f32.mxu0 0.0
        %v1359 = vand.u32 %v318, 4294901760
        %v1360 = vsub.f32 %v318, %v1359
        %1361 = vmatmul.mubr.f32.gmra.mrb[0].mxu0 %v1360
        %v1362 = vpop.f32.mrb[0].mxu0
        %v1363 = vadd.f32 %v1253, %v1362
        %v1364 = vpop.f32.mrb[0].mxu0
        %1365 = vmatprep.mubr.f32.mxu0 0.0
        %v1366 = vand.u32 %v319, 4294901760
        %v1367 = vsub.f32 %v319, %v1366
        %1368 = vmatmul.mubr.f32.gmra.mrb[0].mxu0 %v1367
        %v1369 = vpop.f32.mrb[0].mxu0
        %v1370 = vadd.f32 %v1259, %v1369
        %v1371 = vpop.f32.mrb[0].mxu0
        %1372 = vdwg.mxu0
        %1373 = vmatprep.subr.mxu0 0.0
        %v1374 = vand.u32 %v256, 4294901760
        %1375 = vmatpush1.msra.mxu0 %v1374
        %1376 = vmatprep.subr.mxu0 0.0
        %v1377 = vand.u32 %v257, 4294901760
        %1378 = vmatpush1.msra.mxu0 %v1377
        %1379 = vmatprep.subr.mxu0 0.0
        %v1380 = vand.u32 %v258, 4294901760
        %1381 = vmatpush1.msra.mxu0 %v1380
        %1382 = vmatprep.subr.mxu0 0.0
        %v1383 = vand.u32 %v259, 4294901760
        %1384 = vmatpush1.msra.mxu0 %v1383
        %1385 = vmatprep.subr.mxu0 0.0
        %v1386 = vand.u32 %v260, 4294901760
        %1387 = vmatpush1.msra.mxu0 %v1386
        %1388 = vmatprep.subr.mxu0 0.0
        %v1389 = vand.u32 %v261, 4294901760
        %1390 = vmatpush1.msra.mxu0 %v1389
        %1391 = vmatprep.subr.mxu0 0.0
        %v1392 = vand.u32 %v262, 4294901760
        %1393 = vmatpush1.msra.mxu0 %v1392
        %1394 = vmatprep.subr.mxu0 0.0
        %v1395 = vand.u32 %v263, 4294901760
        %1396 = vmatpush1.msra.mxu0 %v1395
        %1397 = vmatprep.subr.mxu0 0.0
        %v1398 = vand.u32 %v264, 4294901760
        %1399 = vmatpush1.msra.mxu0 %v1398
        %1400 = vmatprep.subr.mxu0 0.0
        %v1401 = vand.u32 %v265, 4294901760
        %1402 = vmatpush1.msra.mxu0 %v1401
        %1403 = vmatprep.subr.mxu0 0.0
        %v1404 = vand.u32 %v266, 4294901760
        %1405 = vmatpush1.msra.mxu0 %v1404
        %1406 = vmatprep.subr.mxu0 0.0
        %v1407 = vand.u32 %v267, 4294901760
        %1408 = vmatpush1.msra.mxu0 %v1407
        %1409 = vmatprep.subr.mxu0 0.0
        %v1410 = vand.u32 %v268, 4294901760
        %1411 = vmatpush1.msra.mxu0 %v1410
        %1412 = vmatprep.subr.mxu0 0.0
        %v1413 = vand.u32 %v269, 4294901760
        %1414 = vmatpush1.msra.mxu0 %v1413
        %1415 = vmatprep.subr.mxu0 0.0
        %v1416 = vand.u32 %v270, 4294901760
        %1417 = vmatpush1.msra.mxu0 %v1416
        %1418 = vmatprep.subr.mxu0 0.0
        %v1419 = vand.u32 %v271, 4294901760
        %1420 = vmatpush1.msra.mxu0 %v1419
        %1421 = vmatprep.subr.mxu0 0.0
        %1422 = vmatpush1.msra.mxu0 0.0
        %1423 = vmatprep.subr.mxu0 0.0
        %1424 = vmatpush1.msra.mxu0 0.0
        %1425 = vmatprep.subr.mxu0 0.0
        %1426 = vmatpush1.msra.mxu0 0.0
        %1427 = vmatprep.subr.mxu0 0.0
        %1428 = vmatpush1.msra.mxu0 0.0
        %1429 = vmatprep.subr.mxu0 0.0
        %1430 = vmatpush1.msra.mxu0 0.0
        %1431 = vmatprep.subr.mxu0 0.0
        %1432 = vmatpush1.msra.mxu0 0.0
        %1433 = vmatprep.subr.mxu0 0.0
        %1434 = vmatpush1.msra.mxu0 0.0
        %1435 = vmatprep.subr.mxu0 0.0
        %1436 = vmatpush1.msra.mxu0 0.0
        %1437 = vmatprep.subr.mxu0 0.0
        %1438 = vmatpush1.msra.mxu0 0.0
        %1439 = vmatprep.subr.mxu0 0.0
        %1440 = vmatpush1.msra.mxu0 0.0
        %1441 = vmatprep.subr.mxu0 0.0
        %1442 = vmatpush1.msra.mxu0 0.0
        %1443 = vmatprep.subr.mxu0 0.0
        %1444 = vmatpush1.msra.mxu0 0.0
        %1445 = vmatprep.subr.mxu0 0.0
        %1446 = vmatpush1.msra.mxu0 0.0
        %1447 = vmatprep.subr.mxu0 0.0
        %1448 = vmatpush1.msra.mxu0 0.0
        %1449 = vmatprep.subr.mxu0 0.0
        %1450 = vmatpush1.msra.mxu0 0.0
        %1451 = vmatprep.subr.mxu0 0.0
        %1452 = vmatpush1.msra.mxu0 0.0
        %1453 = vmatprep.mubr.f32.mxu0 0.0
        %v1454 = vand.u32 %v318, 4294901760
        %v1455 = vsub.f32 %v318, %v1454
        %v1456 = vand.u32 %v1455, 4294901760
        %1457 = vmatmul.mubr.f32.gmra.mrb[0].mxu0 %v1456
        %v1458 = vpop.f32.mrb[0].mxu0
        %v1459 = vadd.f32 %v1363, %v1458
        %v1460 = vpop.f32.mrb[0].mxu0
        %1461 = vmatprep.mubr.f32.mxu0 0.0
        %v1462 = vand.u32 %v319, 4294901760
        %v1463 = vsub.f32 %v319, %v1462
        %v1464 = vand.u32 %v1463, 4294901760
        %1465 = vmatmul.mubr.f32.gmra.mrb[0].mxu0 %v1464
        %v1466 = vpop.f32.mrb[0].mxu0
        %v1467 = vadd.f32 %v1370, %v1466
        %v1468 = vpop.f32.mrb[0].mxu0
        %1469 = vdwg.mxu0
        %1470 = vmatprep.subr.mxu0 0.0
        %v1471 = vand.u32 %v256, 4294901760
        %v1472 = vsub.f32 %v256, %v1471
        %v1473 = vand.u32 %v1472, 4294901760
        %1474 = vmatpush1.msra.mxu0 %v1473
        %1475 = vmatprep.subr.mxu0 0.0
        %v1476 = vand.u32 %v257, 4294901760
        %v1477 = vsub.f32 %v257, %v1476
        %v1478 = vand.u32 %v1477, 4294901760
        %1479 = vmatpush1.msra.mxu0 %v1478
        %1480 = vmatprep.subr.mxu0 0.0
        %v1481 = vand.u32 %v258, 4294901760
        %v1482 = vsub.f32 %v258, %v1481
        %v1483 = vand.u32 %v1482, 4294901760
        %1484 = vmatpush1.msra.mxu0 %v1483
        %1485 = vmatprep.subr.mxu0 0.0
        %v1486 = vand.u32 %v259, 4294901760
        %v1487 = vsub.f32 %v259, %v1486
        %v1488 = vand.u32 %v1487, 4294901760
        %1489 = vmatpush1.msra.mxu0 %v1488
        %1490 = vmatprep.subr.mxu0 0.0
        %v1491 = vand.u32 %v260, 4294901760
        %v1492 = vsub.f32 %v260, %v1491
        %v1493 = vand.u32 %v1492, 4294901760
        %1494 = vmatpush1.msra.mxu0 %v1493
        %1495 = vmatprep.subr.mxu0 0.0
        %v1496 = vand.u32 %v261, 4294901760
        %v1497 = vsub.f32 %v261, %v1496
        %v1498 = vand.u32 %v1497, 4294901760
        %1499 = vmatpush1.msra.mxu0 %v1498
        %1500 = vmatprep.subr.mxu0 0.0
        %v1501 = vand.u32 %v262, 4294901760
        %v1502 = vsub.f32 %v262, %v1501
        %v1503 = vand.u32 %v1502, 4294901760
        %1504 = vmatpush1.msra.mxu0 %v1503
        %1505 = vmatprep.subr.mxu0 0.0
        %v1506 = vand.u32 %v263, 4294901760
        %v1507 = vsub.f32 %v263, %v1506
        %v1508 = vand.u32 %v1507, 4294901760
        %1509 = vmatpush1.msra.mxu0 %v1508
        %1510 = vmatprep.subr.mxu0 0.0
        %v1511 = vand.u32 %v264, 4294901760
        %v1512 = vsub.f32 %v264, %v1511
        %v1513 = vand.u32 %v1512, 4294901760
        %1514 = vmatpush1.msra.mxu0 %v1513
        %1515 = vmatprep.subr.mxu0 0.0
        %v1516 = vand.u32 %v265, 4294901760
        %v1517 = vsub.f32 %v265, %v1516
        %v1518 = vand.u32 %v1517, 4294901760
        %1519 = vmatpush1.msra.mxu0 %v1518
        %1520 = vmatprep.subr.mxu0 0.0
        %v1521 = vand.u32 %v266, 4294901760
        %v1522 = vsub.f32 %v266, %v1521
        %v1523 = vand.u32 %v1522, 4294901760
        %1524 = vmatpush1.msra.mxu0 %v1523
        %1525 = vmatprep.subr.mxu0 0.0
        %v1526 = vand.u32 %v267, 4294901760
        %v1527 = vsub.f32 %v267, %v1526
        %v1528 = vand.u32 %v1527, 4294901760
        %1529 = vmatpush1.msra.mxu0 %v1528
        %1530 = vmatprep.subr.mxu0 0.0
        %v1531 = vand.u32 %v268, 4294901760
        %v1532 = vsub.f32 %v268, %v1531
        %v1533 = vand.u32 %v1532, 4294901760
        %1534 = vmatpush1.msra.mxu0 %v1533
        %1535 = vmatprep.subr.mxu0 0.0
        %v1536 = vand.u32 %v269, 4294901760
        %v1537 = vsub.f32 %v269, %v1536
        %v1538 = vand.u32 %v1537, 4294901760
        %1539 = vmatpush1.msra.mxu0 %v1538
        %1540 = vmatprep.subr.mxu0 0.0
        %v1541 = vand.u32 %v270, 4294901760
        %v1542 = vsub.f32 %v270, %v1541
        %v1543 = vand.u32 %v1542, 4294901760
        %1544 = vmatpush1.msra.mxu0 %v1543
        %1545 = vmatprep.subr.mxu0 0.0
        %v1546 = vand.u32 %v271, 4294901760
        %v1547 = vsub.f32 %v271, %v1546
        %v1548 = vand.u32 %v1547, 4294901760
        %1549 = vmatpush1.msra.mxu0 %v1548
        %1550 = vmatprep.subr.mxu0 0.0
        %1551 = vmatpush1.msra.mxu0 0.0
        %1552 = vmatprep.subr.mxu0 0.0
        %1553 = vmatpush1.msra.mxu0 0.0
        %1554 = vmatprep.subr.mxu0 0.0
        %1555 = vmatpush1.msra.mxu0 0.0
        %1556 = vmatprep.subr.mxu0 0.0
        %1557 = vmatpush1.msra.mxu0 0.0
        %1558 = vmatprep.subr.mxu0 0.0
        %1559 = vmatpush1.msra.mxu0 0.0
        %1560 = vmatprep.subr.mxu0 0.0
        %1561 = vmatpush1.msra.mxu0 0.0
        %1562 = vmatprep.subr.mxu0 0.0
        %1563 = vmatpush1.msra.mxu0 0.0
        %1564 = vmatprep.subr.mxu0 0.0
        %1565 = vmatpush1.msra.mxu0 0.0
        %1566 = vmatprep.subr.mxu0 0.0
        %1567 = vmatpush1.msra.mxu0 0.0
        %1568 = vmatprep.subr.mxu0 0.0
        %1569 = vmatpush1.msra.mxu0 0.0
        %1570 = vmatprep.subr.mxu0 0.0
        %1571 = vmatpush1.msra.mxu0 0.0
        %1572 = vmatprep.subr.mxu0 0.0
        %1573 = vmatpush1.msra.mxu0 0.0
        %1574 = vmatprep.subr.mxu0 0.0
        %1575 = vmatpush1.msra.mxu0 0.0
        %1576 = vmatprep.subr.mxu0 0.0
        %1577 = vmatpush1.msra.mxu0 0.0
        %1578 = vmatprep.subr.mxu0 0.0
        %1579 = vmatpush1.msra.mxu0 0.0
        %1580 = vmatprep.subr.mxu0 0.0
        %1581 = vmatpush1.msra.mxu0 0.0
        %1582 = vmatprep.mubr.f32.mxu0 0.0
        %v1583 = vand.u32 %v318, 4294901760
        %1584 = vmatmul.mubr.f32.gmra.mrb[0].mxu0 %v1583
        %v1585 = vpop.f32.mrb[0].mxu0
        %v1586 = vadd.f32 %v1459, %v1585
        %v1587 = vpop.f32.mrb[0].mxu0
        %1588 = vmatprep.mubr.f32.mxu0 0.0
        %v1589 = vand.u32 %v319, 4294901760
        %1590 = vmatmul.mubr.f32.gmra.mrb[0].mxu0 %v1589
        %v1591 = vpop.f32.mrb[0].mxu0
        %v1592 = vadd.f32 %v1467, %v1591
        %v1593 = vpop.f32.mrb[0].mxu0
        %1594 = vdwg.mxu0
        %1595 = vmatprep.subr.mxu0 0.0
        %v1596 = vand.u32 %v256, 4294901760
        %1597 = vmatpush1.msra.mxu0 %v1596
        %1598 = vmatprep.subr.mxu0 0.0
        %v1599 = vand.u32 %v257, 4294901760
        %1600 = vmatpush1.msra.mxu0 %v1599
        %1601 = vmatprep.subr.mxu0 0.0
        %v1602 = vand.u32 %v258, 4294901760
        %1603 = vmatpush1.msra.mxu0 %v1602
        %1604 = vmatprep.subr.mxu0 0.0
        %v1605 = vand.u32 %v259, 4294901760
        %1606 = vmatpush1.msra.mxu0 %v1605
        %1607 = vmatprep.subr.mxu0 0.0
        %v1608 = vand.u32 %v260, 4294901760
        %1609 = vmatpush1.msra.mxu0 %v1608
        %1610 = vmatprep.subr.mxu0 0.0
        %v1611 = vand.u32 %v261, 4294901760
        %1612 = vmatpush1.msra.mxu0 %v1611
        %1613 = vmatprep.subr.mxu0 0.0
        %v1614 = vand.u32 %v262, 4294901760
        %1615 = vmatpush1.msra.mxu0 %v1614
        %1616 = vmatprep.subr.mxu0 0.0
        %v1617 = vand.u32 %v263, 4294901760
        %1618 = vmatpush1.msra.mxu0 %v1617
        %1619 = vmatprep.subr.mxu0 0.0
        %v1620 = vand.u32 %v264, 4294901760
        %1621 = vmatpush1.msra.mxu0 %v1620
        %1622 = vmatprep.subr.mxu0 0.0
        %v1623 = vand.u32 %v265, 4294901760
        %1624 = vmatpush1.msra.mxu0 %v1623
        %1625 = vmatprep.subr.mxu0 0.0
        %v1626 = vand.u32 %v266, 4294901760
        %1627 = vmatpush1.msra.mxu0 %v1626
        %1628 = vmatprep.subr.mxu0 0.0
        %v1629 = vand.u32 %v267, 4294901760
        %1630 = vmatpush1.msra.mxu0 %v1629
        %1631 = vmatprep.subr.mxu0 0.0
        %v1632 = vand.u32 %v268, 4294901760
        %1633 = vmatpush1.msra.mxu0 %v1632
        %1634 = vmatprep.subr.mxu0 0.0
        %v1635 = vand.u32 %v269, 4294901760
        %1636 = vmatpush1.msra.mxu0 %v1635
        %1637 = vmatprep.subr.mxu0 0.0
        %v1638 = vand.u32 %v270, 4294901760
        %1639 = vmatpush1.msra.mxu0 %v1638
        %1640 = vmatprep.subr.mxu0 0.0
        %v1641 = vand.u32 %v271, 4294901760
        %1642 = vmatpush1.msra.mxu0 %v1641
        %1643 = vmatprep.subr.mxu0 0.0
        %1644 = vmatpush1.msra.mxu0 0.0
        %1645 = vmatprep.subr.mxu0 0.0
        %1646 = vmatpush1.msra.mxu0 0.0
        %1647 = vmatprep.subr.mxu0 0.0
        %1648 = vmatpush1.msra.mxu0 0.0
        %1649 = vmatprep.subr.mxu0 0.0
        %1650 = vmatpush1.msra.mxu0 0.0
        %1651 = vmatprep.subr.mxu0 0.0
        %1652 = vmatpush1.msra.mxu0 0.0
        %1653 = vmatprep.subr.mxu0 0.0
        %1654 = vmatpush1.msra.mxu0 0.0
        %1655 = vmatprep.subr.mxu0 0.0
        %1656 = vmatpush1.msra.mxu0 0.0
        %1657 = vmatprep.subr.mxu0 0.0
        %1658 = vmatpush1.msra.mxu0 0.0
        %1659 = vmatprep.subr.mxu0 0.0
        %1660 = vmatpush1.msra.mxu0 0.0
        %1661 = vmatprep.subr.mxu0 0.0
        %1662 = vmatpush1.msra.mxu0 0.0
        %1663 = vmatprep.subr.mxu0 0.0
        %1664 = vmatpush1.msra.mxu0 0.0
        %1665 = vmatprep.subr.mxu0 0.0
        %1666 = vmatpush1.msra.mxu0 0.0
        %1667 = vmatprep.subr.mxu0 0.0
        %1668 = vmatpush1.msra.mxu0 0.0
        %1669 = vmatprep.subr.mxu0 0.0
        %1670 = vmatpush1.msra.mxu0 0.0
        %1671 = vmatprep.subr.mxu0 0.0
        %1672 = vmatpush1.msra.mxu0 0.0
        %1673 = vmatprep.subr.mxu0 0.0
        %1674 = vmatpush1.msra.mxu0 0.0
        %1675 = vmatprep.mubr.f32.mxu0 0.0
        %v1676 = vand.u32 %v318, 4294901760
        %1677 = vmatmul.mubr.f32.gmra.mrb[0].mxu0 %v1676
        %v1678 = vpop.f32.mrb[0].mxu0
        %v1679 = vadd.f32 %v1586, %v1678
        %v1680 = vpop.f32.mrb[0].mxu0
        %1681 = vmatprep.mubr.f32.mxu0 0.0
        %v1682 = vand.u32 %v319, 4294901760
        %1683 = vmatmul.mubr.f32.gmra.mrb[0].mxu0 %v1682
        %v1684 = vpop.f32.mrb[0].mxu0
        %v1685 = vadd.f32 %v1592, %v1684
        %v1686 = vpop.f32.mrb[0].mxu0
        %1687 = vdwg.mxu0
        %v1688 = vmul.f32 %v995, %v995
        %v1689 = vmul.f32 %v1001, %v1001
        %1690 = vadd.xlane.f32.xlu0 %v1688
        %v1691 = vpop.xlane.xlu0 %1690
        %1692 = vadd.xlane.f32.xlu0 %v1689
        %v1693 = vpop.xlane.xlu0 %1692
        %v1694 = vrsqrt.pop %v1691
        %v1695 = vmul.f32 %v1691, %v1694
        %vm1696 = vcmp.eq.f32.partialorder %v1691, inf
        %v1697 = vsel %vm1696, %v1691, %v1695
        %vm1698 = vcmp.eq.f32.partialorder %v1691, 0.0
        %v1699 = vand.u32 %v1691, 2147483648
        %v1700 = vsel %vm1698, %v1699, %v1697
        %v1701 = vrsqrt.pop %v1693
        %v1702 = vmul.f32 %v1693, %v1701
        %vm1703 = vcmp.eq.f32.partialorder %v1693, inf
        %v1704 = vsel %vm1703, %v1693, %v1702
        %vm1705 = vcmp.eq.f32.partialorder %v1693, 0.0
        %v1706 = vand.u32 %v1693, 2147483648
        %v1707 = vsel %vm1705, %v1706, %v1704
        %v1708 = vmul.f32 %v1679, %v1679
        %v1709 = vmul.f32 %v1685, %v1685
        %1710 = vadd.xlane.f32.xlu0 %v1708
        %v1711 = vpop.xlane.xlu0 %1710
        %1712 = vadd.xlane.f32.xlu0 %v1709
        %v1713 = vpop.xlane.xlu0 %1712
        %v1714 = vrsqrt.pop %v1711
        %v1715 = vmul.f32 %v1711, %v1714
        %vm1716 = vcmp.eq.f32.partialorder %v1711, inf
        %v1717 = vsel %vm1716, %v1711, %v1715
        %vm1718 = vcmp.eq.f32.partialorder %v1711, 0.0
        %v1719 = vand.u32 %v1711, 2147483648
        %v1720 = vsel %vm1718, %v1719, %v1717
        %v1721 = vrsqrt.pop %v1713
        %v1722 = vmul.f32 %v1713, %v1721
        %vm1723 = vcmp.eq.f32.partialorder %v1713, inf
        %v1724 = vsel %vm1723, %v1713, %v1722
        %vm1725 = vcmp.eq.f32.partialorder %v1713, 0.0
        %v1726 = vand.u32 %v1713, 2147483648
        %v1727 = vsel %vm1725, %v1726, %v1724
        %v1728 = vsub.f32 %v1700, %v1720
        %v1729 = vsub.f32 %v1707, %v1727
        %v1730 = vadd.f32 %v1728, 1.0
        %v1731 = vadd.f32 %v1729, 1.0
        %v1732 = vmax.f32 %v1730, 0.0
        %v1733 = vmax.f32 %v1731, 0.0
        %s1734 = smul.u32 %s19, 16
        %v1735 = vlaneseq
        %v1736 = vshrl.u32 %v1735, 7
        %v1737 = vadd.s32 %v1736, 8
        %v1738 = vstv %s1734
        %v1739 = vadd.s32 %v1738, %v1736
        %v1740 = vadd.s32 %v1738, %v1737
        %vm1741 = vcmp.lt.s32.totalorder %v1739, 20
        %vm1742 = vcmp.lt.s32.totalorder %v1740, 20
        %v1743 = vsel %vm1741, %v1732, 0.0
        %v1744 = vsel %vm1742, %v1733, 0.0
        %vm1745 = vcmask 7168
        %v1746 = vsel %vm1745, %v1743, 0.0
        %v1747 = vsel %vm1745, %v1744, 0.0
        %v1748 = vadd.f32 %v1746, %v1747
        %1749 = vadd.xlane.f32.xlu0 %v1748
        %v1750 = vpop.xlane.xlu0 %1749
        %v1751 = vrot.slane %v1750, 4
        %v1752 = vadd.f32 %v1750, %v1751
        %v1753 = vrot.slane %v1752, 2
        %v1754 = vadd.f32 %v1752, %v1753
        %v1755 = vrot.slane %v1754, 1
        %v1756 = vadd.f32 %v1754, %v1755
        %s1757 = vtos %v1756
        %v1758 = vstv %s1757
        %1759 = vst [vmem:[%s237] sm:$0x1] %v1758
        %s1760 = sand.u32 %s126, 1
        %s1761 = scalar_lea.sflag [#allocation4], %s1760
        %s1762 = sand.u32 %s126, 1
        %s1763 = scalar_lea.vmem [#allocation5], %s1762
        // Predicated region
        $region41: #{tpu_custom_call.1} parent=35 // pred_check
          %p1764 = pneg %p136
        $region42: #{tpu_custom_call.1} parent=35 // pred_check_branch
          %1766 = sbr.rel (%p1764) target = $region44
        $region43: #{tpu_custom_call.1} parent=35 // pred_region
          %s1768 = ssub.s32 16, 16
          %1769 = vsyncadd %s1761, %s1768
          %s1770 = smul.addr %s19, 16
          %s1771 = scalar_lea.hbm %s4, %s1770
          %s1773 = sshll.u32 %s1763, 4
          %s1774 = int_to_ptr.vmem [resolvable:$true] %s1773
          %1776 = dma.vmem_to_hbm [thread:$0]  %s1774, 16, %s1771, %s1761
        $region44: #{tpu_custom_call.1} parent=35 // pred_fallthru
          _
      $region36: #{tpu_custom_call.1} parent=5 // pred_fallthru
        _
      %p1777 = scmp.le.s32.totalorder 2, %s14
      // Predicated region
      $region45: #{tpu_custom_call.1} parent=5 // pred_check
        %p1778 = pneg %p1777
      $region46: #{tpu_custom_call.1} parent=5 // pred_check_branch
        %1780 = sbr.rel (%p1778) target = $region48
      $region47: #{tpu_custom_call.1} parent=5 // pred_region
        %s1781 = ssub.s32 %s14, 2
        // Predicated region
        $region49: #{tpu_custom_call.1} parent=47 // pred_check
          %p1782 = pneg %p142
        $region50: #{tpu_custom_call.1} parent=47 // pred_check_branch
          %1784 = sbr.rel (%p1782) target = $region52
        $region51: #{tpu_custom_call.1} parent=47 // pred_region
          %s1785 = sand.u32 %s127, 1
          %s1786 = scalar_lea.sflag [#allocation4], %s1785
          %s1787 = sand.u32 %s127, 1
          %s1788 = scalar_lea.vmem [#allocation5], %s1787
          %1789 = dma.done %s1786, 16
        $region52: #{tpu_custom_call.1} parent=47 // pred_fallthru
          _
      $region48: #{tpu_custom_call.1} parent=5 // pred_fallthru
        _
    $region6: #{tpu_custom_call.1} parent=1 // loop_footer
      %s18 = sadd.s32 1, %s14
    $region7: #{tpu_custom_call.1} parent=1 // loop_footer_branch
      %13 = sbr.rel target = $region3
    $region8: #{tpu_custom_call.1} parent=1 // loop_exit
      _
    %1790 = vsyncpa [#allocation3], 1
    %s1791 = scalar_lea.sflag [#allocation3], 1
    %1792 = vsyncpa %s1791, 1
    %1793 = vsyncpa [#allocation4], 1
    %s1794 = scalar_lea.sflag [#allocation4], 1
    %1795 = vsyncpa %s1794, 1

</llo_original>
